<compile_context>
chip_gen: v7x
topology: tpu7x:2x2x1
jax: 0.10.0
libtpu: 0.0.40
codegen_flags: <defaults>
</compile_context>

<pallas_src>
import functools

import jax
import jax.numpy as jnp
import numpy as np
from jax.experimental import pallas as pl
from jax.experimental.pallas import tpu as pltpu


def _round_up(x, m):
    return ((x + m - 1) // m) * m


# ----------------------------------------------------------------------------
# Recurrent GRU kernel. grid = (batch_blocks ["parallel"], time_chunks ["arbitrary"]).
#
# inputs  : gi_ref   (chunk, Bc, 3*Hp)  precomputed input projection (+biases)
#           whh_ref  (Hp, 3*Hp)         hidden weights, gate-blocked, resident
#           bhhn_ref (1, Hp)            b_hh for the n gate only (f32)
#   [fused] win_ref  (Hp, 3*Hp)         next layer's W_ih^T, resident
#   [fused] bgin_ref (1, 3*Hp)          next layer's folded input bias (f32)
# outputs : out_ref  (chunk, Bc, F)     F=3*Hp -> next layer's GI (fused)
#                                       F=Hp   -> hidden-state sequence (last layer)
#           hlast_ref(Bc, Hp)           final hidden state (f32)
# scratch : h_scratch(Bc, Hp) f32       carried hidden state
# ----------------------------------------------------------------------------
def _gru_recurrent_kernel(*refs, seq_len, chunk, mask_tail, emit_next_gi,
                          unroll):
    if emit_next_gi:
        (gi_ref, whh_ref, bhhn_ref, win_ref, bgin_ref,
         out_ref, hlast_ref, h_scratch) = refs
    else:
        gi_ref, whh_ref, bhhn_ref, out_ref, hlast_ref, h_scratch = refs
        win_ref = bgin_ref = None

    c = pl.program_id(1)                 # time-chunk index (sequential axis)
    Bc, Hp = h_scratch.shape

    @pl.when(c == 0)
    def _():
        h_scratch[...] = jnp.zeros_like(h_scratch)

    whh = whh_ref[...]                                       # resident weights
    bhh_n = jnp.broadcast_to(bhhn_ref[...], (Bc, Hp))        # hoisted broadcast
    if emit_next_gi:
        win = win_ref[...]                                   # resident weights
        bgi_n = jnp.broadcast_to(bgin_ref[...], (Bc, 3 * Hp))

    def step(i, h):
        # Matmuls run in the compute dtype (bf16 by default) with f32 MXU
        # accumulation; gate math stays in f32.
        gi = gi_ref[i].astype(jnp.float32)                   # (Bc, 3*Hp)
        gh = jnp.dot(h.astype(whh.dtype), whh,
                     preferred_element_type=jnp.float32)
        r = jax.nn.sigmoid(gi[:, :Hp] + gh[:, :Hp])
        z = jax.nn.sigmoid(gi[:, Hp:2 * Hp] + gh[:, Hp:2 * Hp])
        n = jnp.tanh(gi[:, 2 * Hp:] + r * (gh[:, 2 * Hp:] + bhh_n))
        h_new = (1.0 - z) * n + z * h
        if mask_tail:
            # Padded tail timesteps must not advance the hidden state.
            h_new = jnp.where(c * chunk + i < seq_len, h_new, h)
        if emit_next_gi:
            # Fused next-layer input projection while h_new is still in vregs:
            # kills the inter-layer HBM round trip and feeds the MXU extra
            # independent work to hide the sequential h@W_hh latency.
            gi_next = jnp.dot(h_new.astype(win.dtype), win,
                              preferred_element_type=jnp.float32)
            out_ref[i] = (gi_next + bgi_n).astype(out_ref.dtype)
        else:
            out_ref[i] = h_new.astype(out_ref.dtype)
        return h_new

    h_final = jax.lax.fori_loop(0, chunk, step, h_scratch[...], unroll=unroll)
    h_scratch[...] = h_final

    @pl.when(c == pl.num_programs(1) - 1)
    def _():
        hlast_ref[...] = h_final.astype(hlast_ref.dtype)


def _vmem_limit_bytes(chunk, batch_block, Hp, out_feat, compute_dtype,
                      emit_next):
    cb = jnp.dtype(compute_dtype).itemsize
    gi_blk = chunk * batch_block * 3 * Hp * cb
    out_blk = chunk * batch_block * out_feat * cb
    whh = Hp * 3 * Hp * cb
    win = Hp * 3 * Hp * cb if emit_next else 0
    bias = 4 * (Hp + 3 * Hp)
    hlast = 4 * batch_block * Hp
    scratch = 4 * batch_block * Hp
    total = 2 * (gi_blk + out_blk + whh + win + bias + hlast) + scratch
    return int(min(64 * 2**20, max(32 * 2**20, 2 * total)))


def _gru_layer_call(gi, lp, next_lp, seq_len, *, chunk, batch_block,
                    compute_dtype):
    """gi: (Tp, Bp, 3*Hp) precomputed input projection (compute dtype).

    Returns (out, h_T) where out is the next layer's GI (Tp, Bp, 3*Hp) for
    fused intermediate layers, or the hidden-state sequence (Tp, Bp, Hp) for
    the final layer; h_T is (Bp, Hp) f32.
    """
    Tp, Bp, _ = gi.shape
    Hp = lp["w_hh_t"].shape[0]
    assert Tp % chunk == 0 and Bp % batch_block == 0
    n_chunks = Tp // chunk
    n_bblocks = Bp // batch_block
    emit_next = next_lp is not None
    out_feat = 3 * Hp if emit_next else Hp

    in_arrays = [gi, lp["w_hh_t"], lp["b_hh_n"]]
    in_specs = [
        pl.BlockSpec((chunk, batch_block, 3 * Hp), lambda b, c: (c, b, 0)),
        pl.BlockSpec((Hp, 3 * Hp), lambda b, c: (0, 0)),   # resident W_hh
        pl.BlockSpec((1, Hp), lambda b, c: (0, 0)),        # b_hh (n gate)
    ]
    if emit_next:
        in_arrays += [next_lp["w_ih_t"], next_lp["b_gi"]]
        in_specs += [
            pl.BlockSpec((Hp, 3 * Hp), lambda b, c: (0, 0)),   # next W_ih
            pl.BlockSpec((1, 3 * Hp), lambda b, c: (0, 0)),    # next folded bias
        ]

    out_p, h_p = pl.pallas_call(
        functools.partial(
            _gru_recurrent_kernel, seq_len=seq_len, chunk=chunk,
            mask_tail=(Tp != seq_len), emit_next_gi=emit_next,
            unroll=min(chunk, 4)),
        out_shape=(
            jax.ShapeDtypeStruct((Tp, Bp, out_feat), compute_dtype),
            jax.ShapeDtypeStruct((Bp, Hp), jnp.float32),
        ),
        grid_spec=pltpu.PrefetchScalarGridSpec(
            num_scalar_prefetch=0,
            grid=(n_bblocks, n_chunks),
            in_specs=in_specs,
            out_specs=[
                pl.BlockSpec((chunk, batch_block, out_feat),
                             lambda b, c: (c, b, 0)),          # lane-dense
                pl.BlockSpec((batch_block, Hp), lambda b, c: (b, 0)),
            ],
            scratch_shapes=[pltpu.VMEM((batch_block, Hp), jnp.float32)],
        ),
        compiler_params=pltpu.CompilerParams(
            dimension_semantics=("parallel", "arbitrary"),
            vmem_limit_bytes=_vmem_limit_bytes(
                chunk, batch_block, Hp, out_feat, compute_dtype, emit_next)),
    )(*in_arrays)
    return out_p, h_p


# ---------------------------- parameter handling ----------------------------
def init_encoder_params(key, vocab_size, embed_size, num_hiddens, num_layers):
    """PyTorch-layout params (for the reference path and repacking)."""
    keys = jax.random.split(key, 1 + 4 * num_layers)
    params = {"embedding": jax.random.normal(
        keys[0], (vocab_size, embed_size), jnp.float32)}
    k = 1.0 / np.sqrt(num_hiddens)
    for l in range(num_layers):
        in_size = embed_size if l == 0 else num_hiddens
        kw = keys[1 + 4 * l: 1 + 4 * (l + 1)]
        params[f"w_ih_{l}"] = jax.random.uniform(
            kw[0], (3 * num_hiddens, in_size), jnp.float32, -k, k)
        params[f"w_hh_{l}"] = jax.random.uniform(
            kw[1], (3 * num_hiddens, num_hiddens), jnp.float32, -k, k)
        params[f"b_ih_{l}"] = jax.random.uniform(
            kw[2], (3 * num_hiddens,), jnp.float32, -k, k)
        params[f"b_hh_{l}"] = jax.random.uniform(
            kw[3], (3 * num_hiddens,), jnp.float32, -k, k)
    return params


def prepare_encoder_params(params, embed_size, num_hiddens, num_layers,
                           compute_dtype=jnp.bfloat16):
    """One-time repack: transpose, gate-block, lane-pad, fold biases, cast weights."""
    H = num_hiddens
    # NOTE: on v6e/v7x (2x256x256 MXU), picking H so that Hp is a multiple of
    # 256 fills the contraction dim better; 128 is optimal for v5e.
    Hp = _round_up(H, 128)
    prepared = {"embedding": params["embedding"]}
    for l in range(num_layers):
        real_in = embed_size if l == 0 else H
        # Layers >= 1 consume the kernel's (Bc, Hp) hidden state directly
        # (fused projection), so their input dim is padded to Hp.
        packed_in = embed_size if l == 0 else Hp
        w_ih = params[f"w_ih_{l}"]          # (3H, real_in), gate order [r, z, n]
        w_hh = params[f"w_hh_{l}"]          # (3H, H)
        b_ih = params[f"b_ih_{l}"]
        b_hh = params[f"b_hh_{l}"]

        w_ih_t = jnp.zeros((packed_in, 3 * Hp), jnp.float32)
        w_hh_t = jnp.zeros((Hp, 3 * Hp), jnp.float32)
        b_gi = jnp.zeros((1, 3 * Hp), jnp.float32)
        for g in range(3):
            w_ih_t = w_ih_t.at[:real_in, g * Hp:g * Hp + H].set(
                w_ih[g * H:(g + 1) * H, :].T)
            w_hh_t = w_hh_t.at[:H, g * Hp:g * Hp + H].set(
                w_hh[g * H:(g + 1) * H, :].T)
            bias = b_ih[g * H:(g + 1) * H]
            if g < 2:  # r, z: b_hh folds into the input projection
                bias = bias + b_hh[g * H:(g + 1) * H]
            b_gi = b_gi.at[0, g * Hp:g * Hp + H].set(bias)
        b_hh_n = jnp.zeros((1, Hp), jnp.float32).at[0, :H].set(b_hh[2 * H:])

        prepared[f"layer_{l}"] = {
            "w_ih_t": w_ih_t.astype(compute_dtype),   # MXU operand -> bf16
            "w_hh_t": w_hh_t.astype(compute_dtype),   # MXU operand -> bf16
            "b_gi": b_gi,                             # stays f32
            "b_hh_n": b_hh_n,                         # stays f32
        }
    return prepared


def encoder_forward(prepared, X, num_hiddens, num_layers, *, chunk=4,
                    batch_block=None, compute_dtype=jnp.bfloat16):
    """X: (batch, seq) int32 ids -> (output (seq,batch,H) f32, state (L,batch,H) f32)."""
    H = num_hiddens
    emb = jnp.take(prepared["embedding"], X, axis=0)   # (batch, seq, E) gather
    x = jnp.transpose(emb, (1, 0, 2))                  # (seq, batch, E) == permute(1,0,2)
    T, B, _ = x.shape
    Hp = prepared["layer_0"]["w_hh_t"].shape[0]

    chunk = max(1, min(chunk, T))
    n_chunks = -(-T // chunk)
    Tp = n_chunks * chunk
    Bp = max(8, _round_up(B, 8))
    if batch_block is None:
        # Split the batch into >=2 blocks when possible so v7x's two TCs get
        # independent shards ("parallel" grid axis); no effect on v5e/v6e.
        batch_block = Bp // 2 if (Bp >= 16 and Bp % 16 == 0) else Bp

    # Pad the small (T,B,E) activations ONCE, before the big projection matmul,
    # so GI is never re-materialized by a second pad.
    x = jnp.pad(x, ((0, Tp - T), (0, Bp - B), (0, 0)))

    # Hoisted layer-0 input projection: one big MXU-friendly matmul in XLA.
    lp0 = prepared["layer_0"]
    gi = (jnp.einsum("tbe,eg->tbg", x.astype(compute_dtype), lp0["w_ih_t"],
                     preferred_element_type=jnp.float32)
          + lp0["b_gi"]).astype(compute_dtype)          # (Tp, Bp, 3*Hp)

    states = []
    out = gi
    for l in range(num_layers):
        lp = prepared[f"layer_{l}"]
        next_lp = prepared.get(f"layer_{l + 1}")        # None for final layer
        out, h = _gru_layer_call(out, lp, next_lp, T, chunk=chunk,
                                 batch_block=batch_block,
                                 compute_dtype=compute_dtype)
        states.append(h)
        # For intermediate layers `out` already IS the next layer's GI.

    output = out[:T, :B, :H].astype(jnp.float32)
    state = jnp.stack(states, axis=0)[:, :B, :H]
    return output, state


# ---------------- pure-JAX reference (for correctness check) ----------------
def _gru_layer_ref(x_seq, w_ih, w_hh, b_ih, b_hh):
    H = w_hh.shape[1]

    def step(h, x):
        gi = x @ w_ih.T + b_ih
        gh = h @ w_hh.T + b_hh
        r = jax.nn.sigmoid(gi[:, :H] + gh[:, :H])
        z = jax.nn.sigmoid(gi[:, H:2 * H] + gh[:, H:2 * H])
        n = jnp.tanh(gi[:, 2 * H:] + r * gh[:, 2 * H:])
        h_new = (1.0 - z) * n + z * h
        return h_new, h_new

    h0 = jnp.zeros((x_seq.shape[1], H), jnp.float32)
    hT, out = jax.lax.scan(step, h0, x_seq)
    return out, hT


def encoder_forward_ref(params, X, num_layers):
    emb = jnp.take(params["embedding"], X, axis=0)
    x = jnp.transpose(emb, (1, 0, 2))
    states = []
    for l in range(num_layers):
        x, h = _gru_layer_ref(x, params[f"w_ih_{l}"], params[f"w_hh_{l}"],
                              params[f"b_ih_{l}"], params[f"b_hh_{l}"])
        states.append(h)
    return x, jnp.stack(states, axis=0)


if __name__ == "__main__":
    vocab_size, embed_size, num_hiddens, num_layers = 40, 32, 32, 2
    batch, seq_len = 2, 8

    key = jax.random.PRNGKey(0)
    pkey, xkey = jax.random.split(key)
    params = init_encoder_params(pkey, vocab_size, embed_size,
                                 num_hiddens, num_layers)
    X = jax.random.randint(xkey, (batch, seq_len), 0, vocab_size, jnp.int32)

    ref_out, ref_state = encoder_forward_ref(params, X, num_layers)

    # --- f32 path: tight check of kernel math / layer fusion. ---
    prep32 = prepare_encoder_params(params, embed_size, num_hiddens,
                                    num_layers, compute_dtype=jnp.float32)
    out32, st32 = encoder_forward(prep32, X, num_hiddens, num_layers,
                                  compute_dtype=jnp.float32)
    out32 = jax.block_until_ready(out32)
    st32 = jax.block_until_ready(st32)
    assert out32.shape == (seq_len, batch, num_hiddens)
    assert st32.shape == (num_layers, batch, num_hiddens)
    np.testing.assert_allclose(np.asarray(out32), np.asarray(ref_out),
                               rtol=1e-4, atol=1e-4)
    np.testing.assert_allclose(np.asarray(st32), np.asarray(ref_state),
                               rtol=1e-4, atol=1e-4)

    # --- bf16 path (default production config): looser tolerance. ---
    prep16 = prepare_encoder_params(params, embed_size, num_hiddens,
                                    num_layers, compute_dtype=jnp.bfloat16)
    out16, st16 = encoder_forward(prep16, X, num_hiddens, num_layers,
                                  compute_dtype=jnp.bfloat16)
    out16 = jax.block_until_ready(out16)
    st16 = jax.block_until_ready(st16)
    np.testing.assert_allclose(np.asarray(out16), np.asarray(ref_out),
                               rtol=5e-2, atol=5e-2)
    np.testing.assert_allclose(np.asarray(st16), np.asarray(ref_state),
                               rtol=5e-2, atol=5e-2)

    print("KERNEL_OK")
</pallas_src>

<mosaic_0001>
module attributes {stable_mosaic.version = 11 : i64} {
  func.func @_gru_recurrent_kernel(%arg0: i32, %arg1: i32, %arg2: memref<4x8x384xf32, #tpu.memory_space<vmem>>, %arg3: memref<128x384xf32, #tpu.memory_space<vmem>>, %arg4: memref<1x128xf32, #tpu.memory_space<vmem>>, %arg5: memref<128x384xf32, #tpu.memory_space<vmem>>, %arg6: memref<1x384xf32, #tpu.memory_space<vmem>>, %arg7: memref<4x8x384xf32, #tpu.memory_space<vmem>>, %arg8: memref<8x128xf32, #tpu.memory_space<vmem>>, %arg9: memref<8x128xf32, #tpu.memory_space<vmem>>) attributes {dimension_semantics = [#tpu.dimension_semantics<parallel>, #tpu.dimension_semantics<arbitrary>], iteration_bounds = array<i64: 1, 2>, scalar_prefetch = 0 : i64, scratch_operands = 1 : i64, tpu.core_type = #tpu.core_type<tc>, window_params = [{transform_indices = @transform_0, window_bounds = array<i64: 4, 8, 384>}, {pipeline_mode = #tpu.pipeline_mode<synchronous>, transform_indices = @transform_1, window_bounds = array<i64: 128, 384>}, {pipeline_mode = #tpu.pipeline_mode<synchronous>, transform_indices = @transform_2, window_bounds = array<i64: 1, 128>}, {pipeline_mode = #tpu.pipeline_mode<synchronous>, transform_indices = @transform_3, window_bounds = array<i64: 128, 384>}, {pipeline_mode = #tpu.pipeline_mode<synchronous>, transform_indices = @transform_4, window_bounds = array<i64: 1, 384>}, {transform_indices = @transform_5, window_bounds = array<i64: 4, 8, 384>}, {transform_indices = @transform_6, window_bounds = array<i64: 8, 128>}]} {
    %c0_i32 = arith.constant 0 : i32
    %0 = arith.cmpi eq, %arg1, %c0_i32 : i32
    %1 = arith.extui %0 : i1 to i32
    %c0_i32_0 = arith.constant 0 : i32
    %2 = arith.cmpi ne, %1, %c0_i32_0 : i32
    scf.if %2 {
      %cst_50 = arith.constant 0.000000e+00 : f32
      %164 = vector.broadcast %cst_50 : f32 to vector<8x128xf32>
      %c0_51 = arith.constant 0 : index
      %c0_52 = arith.constant 0 : index
      %165 = vector.load %arg9[%c0_51, %c0_52] : memref<8x128xf32, #tpu.memory_space<vmem>>, vector<8x128xf32>
      tpu.vector_store %arg9[%c0_51, %c0_52], %164 {strides = array<i32>} : memref<8x128xf32, #tpu.memory_space<vmem>>, vector<8x128xf32>,
    } else {
    }
    %c0 = arith.constant 0 : index
    %c0_1 = arith.constant 0 : index
    %3 = vector.load %arg3[%c0, %c0_1] : memref<128x384xf32, #tpu.memory_space<vmem>>, vector<128x384xf32>
    %c0_2 = arith.constant 0 : index
    %c0_3 = arith.constant 0 : index
    %4 = vector.load %arg4[%c0_2, %c0_3] : memref<1x128xf32, #tpu.memory_space<vmem>>, vector<1x128xf32>
    %5 = vector.shape_cast %4 : vector<1x128xf32> to vector<1x128xf32>
    %6 = vector.broadcast %5 : vector<1x128xf32> to vector<8x128xf32>
    %c0_4 = arith.constant 0 : index
    %c0_5 = arith.constant 0 : index
    %7 = vector.load %arg5[%c0_4, %c0_5] : memref<128x384xf32, #tpu.memory_space<vmem>>, vector<128x384xf32>
    %c0_6 = arith.constant 0 : index
    %c0_7 = arith.constant 0 : index
    %8 = vector.load %arg6[%c0_6, %c0_7] : memref<1x384xf32, #tpu.memory_space<vmem>>, vector<1x384xf32>
    %9 = vector.shape_cast %8 : vector<1x384xf32> to vector<1x384xf32>
    %10 = vector.broadcast %9 : vector<1x384xf32> to vector<8x384xf32>
    %c0_8 = arith.constant 0 : index
    %c0_9 = arith.constant 0 : index
    %11 = vector.load %arg9[%c0_8, %c0_9] : memref<8x128xf32, #tpu.memory_space<vmem>>, vector<8x128xf32>
    %c0_i32_10 = arith.constant 0 : i32
    %12 = arith.index_cast %c0_i32_10 : i32 to index
    %c0_11 = arith.constant 0 : index
    %c0_12 = arith.constant 0 : index
    %13 = vector.load %arg2[%12, %c0_11, %c0_12] : memref<4x8x384xf32, #tpu.memory_space<vmem>>, vector<1x8x384xf32>
    %14 = vector.shape_cast %13 : vector<1x8x384xf32> to vector<8x384xf32>
    %cst = arith.constant dense<0.000000e+00> : vector<8x384xf32>
    %15 = tpu.matmul %11, %3, %cst {dimension_numbers = #tpu.dot_dimension_numbers<[1], [0], [0], [1], [0, 0, 1, 1], [], []>} : vector<8x128xf32>, vector<128x384xf32>, vector<8x384xf32> -> vector<8x384xf32>
    %16 = vector.extract_strided_slice %14 {offsets = [0, 0], sizes = [8, 128], strides = [1, 1]} : vector<8x384xf32> to vector<8x128xf32>
    %17 = vector.extract_strided_slice %15 {offsets = [0, 0], sizes = [8, 128], strides = [1, 1]} : vector<8x384xf32> to vector<8x128xf32>
    %18 = arith.addf %16, %17 : vector<8x128xf32>
    %19 = arith.negf %18 : vector<8x128xf32>
    %20 = math.exp %19 : vector<8x128xf32>
    %cst_13 = arith.constant 1.000000e+00 : f32
    %21 = vector.broadcast %cst_13 : f32 to vector<8x128xf32>
    %22 = arith.addf %21, %20 : vector<8x128xf32>
    %23 = arith.divf %21, %22 : vector<8x128xf32>
    %24 = vector.extract_strided_slice %14 {offsets = [0, 128], sizes = [8, 128], strides = [1, 1]} : vector<8x384xf32> to vector<8x128xf32>
    %25 = vector.extract_strided_slice %15 {offsets = [0, 128], sizes = [8, 128], strides = [1, 1]} : vector<8x384xf32> to vector<8x128xf32>
    %26 = arith.addf %24, %25 : vector<8x128xf32>
    %27 = arith.negf %26 : vector<8x128xf32>
    %28 = math.exp %27 : vector<8x128xf32>
    %cst_14 = arith.constant 1.000000e+00 : f32
    %29 = vector.broadcast %cst_14 : f32 to vector<8x128xf32>
    %30 = arith.addf %29, %28 : vector<8x128xf32>
    %31 = arith.divf %29, %30 : vector<8x128xf32>
    %32 = vector.extract_strided_slice %14 {offsets = [0, 256], sizes = [8, 128], strides = [1, 1]} : vector<8x384xf32> to vector<8x128xf32>
    %33 = vector.extract_strided_slice %15 {offsets = [0, 256], sizes = [8, 128], strides = [1, 1]} : vector<8x384xf32> to vector<8x128xf32>
    %34 = arith.addf %33, %6 : vector<8x128xf32>
    %35 = arith.mulf %23, %34 : vector<8x128xf32>
    %36 = arith.addf %32, %35 : vector<8x128xf32>
    %37 = math.tanh %36 : vector<8x128xf32>
    %cst_15 = arith.constant 1.000000e+00 : f32
    %38 = vector.broadcast %cst_15 : f32 to vector<8x128xf32>
    %39 = arith.subf %38, %31 : vector<8x128xf32>
    %40 = arith.mulf %39, %37 : vector<8x128xf32>
    %41 = arith.mulf %31, %11 : vector<8x128xf32>
    %42 = arith.addf %40, %41 : vector<8x128xf32>
    %cst_16 = arith.constant dense<0.000000e+00> : vector<8x384xf32>
    %43 = tpu.matmul %42, %7, %cst_16 {dimension_numbers = #tpu.dot_dimension_numbers<[1], [0], [0], [1], [0, 0, 1, 1], [], []>} : vector<8x128xf32>, vector<128x384xf32>, vector<8x384xf32> -> vector<8x384xf32>
    %44 = arith.addf %43, %10 : vector<8x384xf32>
    %45 = arith.index_cast %c0_i32_10 : i32 to index
    %c0_17 = arith.constant 0 : index
    %c0_18 = arith.constant 0 : index
    %46 = vector.load %arg7[%45, %c0_17, %c0_18] : memref<4x8x384xf32, #tpu.memory_space<vmem>>, vector<1x8x384xf32>
    %47 = vector.shape_cast %46 : vector<1x8x384xf32> to vector<8x384xf32>
    %48 = vector.shape_cast %44 : vector<8x384xf32> to vector<1x8x384xf32>
    tpu.vector_store %arg7[%45, %c0_17, %c0_18], %48 {strides = array<i32>} : memref<4x8x384xf32, #tpu.memory_space<vmem>>, vector<1x8x384xf32>,
    %c1_i32 = arith.constant 1 : i32
    %49 = arith.index_cast %c1_i32 : i32 to index
    %c0_19 = arith.constant 0 : index
    %c0_20 = arith.constant 0 : index
    %50 = vector.load %arg2[%49, %c0_19, %c0_20] : memref<4x8x384xf32, #tpu.memory_space<vmem>>, vector<1x8x384xf32>
    %51 = vector.shape_cast %50 : vector<1x8x384xf32> to vector<8x384xf32>
    %cst_21 = arith.constant dense<0.000000e+00> : vector<8x384xf32>
    %52 = tpu.matmul %42, %3, %cst_21 {dimension_numbers = #tpu.dot_dimension_numbers<[1], [0], [0], [1], [0, 0, 1, 1], [], []>} : vector<8x128xf32>, vector<128x384xf32>, vector<8x384xf32> -> vector<8x384xf32>
    %53 = vector.extract_strided_slice %51 {offsets = [0, 0], sizes = [8, 128], strides = [1, 1]} : vector<8x384xf32> to vector<8x128xf32>
    %54 = vector.extract_strided_slice %52 {offsets = [0, 0], sizes = [8, 128], strides = [1, 1]} : vector<8x384xf32> to vector<8x128xf32>
    %55 = arith.addf %53, %54 : vector<8x128xf32>
    %56 = arith.negf %55 : vector<8x128xf32>
    %57 = math.exp %56 : vector<8x128xf32>
    %cst_22 = arith.constant 1.000000e+00 : f32
    %58 = vector.broadcast %cst_22 : f32 to vector<8x128xf32>
    %59 = arith.addf %58, %57 : vector<8x128xf32>
    %60 = arith.divf %58, %59 : vector<8x128xf32>
    %61 = vector.extract_strided_slice %51 {offsets = [0, 128], sizes = [8, 128], strides = [1, 1]} : vector<8x384xf32> to vector<8x128xf32>
    %62 = vector.extract_strided_slice %52 {offsets = [0, 128], sizes = [8, 128], strides = [1, 1]} : vector<8x384xf32> to vector<8x128xf32>
    %63 = arith.addf %61, %62 : vector<8x128xf32>
    %64 = arith.negf %63 : vector<8x128xf32>
    %65 = math.exp %64 : vector<8x128xf32>
    %cst_23 = arith.constant 1.000000e+00 : f32
    %66 = vector.broadcast %cst_23 : f32 to vector<8x128xf32>
    %67 = arith.addf %66, %65 : vector<8x128xf32>
    %68 = arith.divf %66, %67 : vector<8x128xf32>
    %69 = vector.extract_strided_slice %51 {offsets = [0, 256], sizes = [8, 128], strides = [1, 1]} : vector<8x384xf32> to vector<8x128xf32>
    %70 = vector.extract_strided_slice %52 {offsets = [0, 256], sizes = [8, 128], strides = [1, 1]} : vector<8x384xf32> to vector<8x128xf32>
    %71 = arith.addf %70, %6 : vector<8x128xf32>
    %72 = arith.mulf %60, %71 : vector<8x128xf32>
    %73 = arith.addf %69, %72 : vector<8x128xf32>
    %74 = math.tanh %73 : vector<8x128xf32>
    %cst_24 = arith.constant 1.000000e+00 : f32
    %75 = vector.broadcast %cst_24 : f32 to vector<8x128xf32>
    %76 = arith.subf %75, %68 : vector<8x128xf32>
    %77 = arith.mulf %76, %74 : vector<8x128xf32>
    %78 = arith.mulf %68, %42 : vector<8x128xf32>
    %79 = arith.addf %77, %78 : vector<8x128xf32>
    %cst_25 = arith.constant dense<0.000000e+00> : vector<8x384xf32>
    %80 = tpu.matmul %79, %7, %cst_25 {dimension_numbers = #tpu.dot_dimension_numbers<[1], [0], [0], [1], [0, 0, 1, 1], [], []>} : vector<8x128xf32>, vector<128x384xf32>, vector<8x384xf32> -> vector<8x384xf32>
    %81 = arith.addf %80, %10 : vector<8x384xf32>
    %82 = arith.index_cast %c1_i32 : i32 to index
    %c0_26 = arith.constant 0 : index
    %c0_27 = arith.constant 0 : index
    %83 = vector.load %arg7[%82, %c0_26, %c0_27] : memref<4x8x384xf32, #tpu.memory_space<vmem>>, vector<1x8x384xf32>
    %84 = vector.shape_cast %83 : vector<1x8x384xf32> to vector<8x384xf32>
    %85 = vector.shape_cast %81 : vector<8x384xf32> to vector<1x8x384xf32>
    tpu.vector_store %arg7[%82, %c0_26, %c0_27], %85 {strides = array<i32>} : memref<4x8x384xf32, #tpu.memory_space<vmem>>, vector<1x8x384xf32>,
    %c2_i32 = arith.constant 2 : i32
    %86 = arith.index_cast %c2_i32 : i32 to index
    %c0_28 = arith.constant 0 : index
    %c0_29 = arith.constant 0 : index
    %87 = vector.load %arg2[%86, %c0_28, %c0_29] : memref<4x8x384xf32, #tpu.memory_space<vmem>>, vector<1x8x384xf32>
    %88 = vector.shape_cast %87 : vector<1x8x384xf32> to vector<8x384xf32>
    %cst_30 = arith.constant dense<0.000000e+00> : vector<8x384xf32>
    %89 = tpu.matmul %79, %3, %cst_30 {dimension_numbers = #tpu.dot_dimension_numbers<[1], [0], [0], [1], [0, 0, 1, 1], [], []>} : vector<8x128xf32>, vector<128x384xf32>, vector<8x384xf32> -> vector<8x384xf32>
    %90 = vector.extract_strided_slice %88 {offsets = [0, 0], sizes = [8, 128], strides = [1, 1]} : vector<8x384xf32> to vector<8x128xf32>
    %91 = vector.extract_strided_slice %89 {offsets = [0, 0], sizes = [8, 128], strides = [1, 1]} : vector<8x384xf32> to vector<8x128xf32>
    %92 = arith.addf %90, %91 : vector<8x128xf32>
    %93 = arith.negf %92 : vector<8x128xf32>
    %94 = math.exp %93 : vector<8x128xf32>
    %cst_31 = arith.constant 1.000000e+00 : f32
    %95 = vector.broadcast %cst_31 : f32 to vector<8x128xf32>
    %96 = arith.addf %95, %94 : vector<8x128xf32>
    %97 = arith.divf %95, %96 : vector<8x128xf32>
    %98 = vector.extract_strided_slice %88 {offsets = [0, 128], sizes = [8, 128], strides = [1, 1]} : vector<8x384xf32> to vector<8x128xf32>
    %99 = vector.extract_strided_slice %89 {offsets = [0, 128], sizes = [8, 128], strides = [1, 1]} : vector<8x384xf32> to vector<8x128xf32>
    %100 = arith.addf %98, %99 : vector<8x128xf32>
    %101 = arith.negf %100 : vector<8x128xf32>
    %102 = math.exp %101 : vector<8x128xf32>
    %cst_32 = arith.constant 1.000000e+00 : f32
    %103 = vector.broadcast %cst_32 : f32 to vector<8x128xf32>
    %104 = arith.addf %103, %102 : vector<8x128xf32>
    %105 = arith.divf %103, %104 : vector<8x128xf32>
    %106 = vector.extract_strided_slice %88 {offsets = [0, 256], sizes = [8, 128], strides = [1, 1]} : vector<8x384xf32> to vector<8x128xf32>
    %107 = vector.extract_strided_slice %89 {offsets = [0, 256], sizes = [8, 128], strides = [1, 1]} : vector<8x384xf32> to vector<8x128xf32>
    %108 = arith.addf %107, %6 : vector<8x128xf32>
    %109 = arith.mulf %97, %108 : vector<8x128xf32>
    %110 = arith.addf %106, %109 : vector<8x128xf32>
    %111 = math.tanh %110 : vector<8x128xf32>
    %cst_33 = arith.constant 1.000000e+00 : f32
    %112 = vector.broadcast %cst_33 : f32 to vector<8x128xf32>
    %113 = arith.subf %112, %105 : vector<8x128xf32>
    %114 = arith.mulf %113, %111 : vector<8x128xf32>
    %115 = arith.mulf %105, %79 : vector<8x128xf32>
    %116 = arith.addf %114, %115 : vector<8x128xf32>
    %cst_34 = arith.constant dense<0.000000e+00> : vector<8x384xf32>
    %117 = tpu.matmul %116, %7, %cst_34 {dimension_numbers = #tpu.dot_dimension_numbers<[1], [0], [0], [1], [0, 0, 1, 1], [], []>} : vector<8x128xf32>, vector<128x384xf32>, vector<8x384xf32> -> vector<8x384xf32>
    %118 = arith.addf %117, %10 : vector<8x384xf32>
    %119 = arith.index_cast %c2_i32 : i32 to index
    %c0_35 = arith.constant 0 : index
    %c0_36 = arith.constant 0 : index
    %120 = vector.load %arg7[%119, %c0_35, %c0_36] : memref<4x8x384xf32, #tpu.memory_space<vmem>>, vector<1x8x384xf32>
    %121 = vector.shape_cast %120 : vector<1x8x384xf32> to vector<8x384xf32>
    %122 = vector.shape_cast %118 : vector<8x384xf32> to vector<1x8x384xf32>
    tpu.vector_store %arg7[%119, %c0_35, %c0_36], %122 {strides = array<i32>} : memref<4x8x384xf32, #tpu.memory_space<vmem>>, vector<1x8x384xf32>,
    %c3_i32 = arith.constant 3 : i32
    %123 = arith.index_cast %c3_i32 : i32 to index
    %c0_37 = arith.constant 0 : index
    %c0_38 = arith.constant 0 : index
    %124 = vector.load %arg2[%123, %c0_37, %c0_38] : memref<4x8x384xf32, #tpu.memory_space<vmem>>, vector<1x8x384xf32>
    %125 = vector.shape_cast %124 : vector<1x8x384xf32> to vector<8x384xf32>
    %cst_39 = arith.constant dense<0.000000e+00> : vector<8x384xf32>
    %126 = tpu.matmul %116, %3, %cst_39 {dimension_numbers = #tpu.dot_dimension_numbers<[1], [0], [0], [1], [0, 0, 1, 1], [], []>} : vector<8x128xf32>, vector<128x384xf32>, vector<8x384xf32> -> vector<8x384xf32>
    %127 = vector.extract_strided_slice %125 {offsets = [0, 0], sizes = [8, 128], strides = [1, 1]} : vector<8x384xf32> to vector<8x128xf32>
    %128 = vector.extract_strided_slice %126 {offsets = [0, 0], sizes = [8, 128], strides = [1, 1]} : vector<8x384xf32> to vector<8x128xf32>
    %129 = arith.addf %127, %128 : vector<8x128xf32>
    %130 = arith.negf %129 : vector<8x128xf32>
    %131 = math.exp %130 : vector<8x128xf32>
    %cst_40 = arith.constant 1.000000e+00 : f32
    %132 = vector.broadcast %cst_40 : f32 to vector<8x128xf32>
    %133 = arith.addf %132, %131 : vector<8x128xf32>
    %134 = arith.divf %132, %133 : vector<8x128xf32>
    %135 = vector.extract_strided_slice %125 {offsets = [0, 128], sizes = [8, 128], strides = [1, 1]} : vector<8x384xf32> to vector<8x128xf32>
    %136 = vector.extract_strided_slice %126 {offsets = [0, 128], sizes = [8, 128], strides = [1, 1]} : vector<8x384xf32> to vector<8x128xf32>
    %137 = arith.addf %135, %136 : vector<8x128xf32>
    %138 = arith.negf %137 : vector<8x128xf32>
    %139 = math.exp %138 : vector<8x128xf32>
    %cst_41 = arith.constant 1.000000e+00 : f32
    %140 = vector.broadcast %cst_41 : f32 to vector<8x128xf32>
    %141 = arith.addf %140, %139 : vector<8x128xf32>
    %142 = arith.divf %140, %141 : vector<8x128xf32>
    %143 = vector.extract_strided_slice %125 {offsets = [0, 256], sizes = [8, 128], strides = [1, 1]} : vector<8x384xf32> to vector<8x128xf32>
    %144 = vector.extract_strided_slice %126 {offsets = [0, 256], sizes = [8, 128], strides = [1, 1]} : vector<8x384xf32> to vector<8x128xf32>
    %145 = arith.addf %144, %6 : vector<8x128xf32>
    %146 = arith.mulf %134, %145 : vector<8x128xf32>
    %147 = arith.addf %143, %146 : vector<8x128xf32>
    %148 = math.tanh %147 : vector<8x128xf32>
    %cst_42 = arith.constant 1.000000e+00 : f32
    %149 = vector.broadcast %cst_42 : f32 to vector<8x128xf32>
    %150 = arith.subf %149, %142 : vector<8x128xf32>
    %151 = arith.mulf %150, %148 : vector<8x128xf32>
    %152 = arith.mulf %142, %116 : vector<8x128xf32>
    %153 = arith.addf %151, %152 : vector<8x128xf32>
    %cst_43 = arith.constant dense<0.000000e+00> : vector<8x384xf32>
    %154 = tpu.matmul %153, %7, %cst_43 {dimension_numbers = #tpu.dot_dimension_numbers<[1], [0], [0], [1], [0, 0, 1, 1], [], []>} : vector<8x128xf32>, vector<128x384xf32>, vector<8x384xf32> -> vector<8x384xf32>
    %155 = arith.addf %154, %10 : vector<8x384xf32>
    %156 = arith.index_cast %c3_i32 : i32 to index
    %c0_44 = arith.constant 0 : index
    %c0_45 = arith.constant 0 : index
    %157 = vector.load %arg7[%156, %c0_44, %c0_45] : memref<4x8x384xf32, #tpu.memory_space<vmem>>, vector<1x8x384xf32>
    %158 = vector.shape_cast %157 : vector<1x8x384xf32> to vector<8x384xf32>
    %159 = vector.shape_cast %155 : vector<8x384xf32> to vector<1x8x384xf32>
    tpu.vector_store %arg7[%156, %c0_44, %c0_45], %159 {strides = array<i32>} : memref<4x8x384xf32, #tpu.memory_space<vmem>>, vector<1x8x384xf32>,
    %c4_i32 = arith.constant 4 : i32
    %c0_46 = arith.constant 0 : index
    %c0_47 = arith.constant 0 : index
    %160 = vector.load %arg9[%c0_46, %c0_47] : memref<8x128xf32, #tpu.memory_space<vmem>>, vector<8x128xf32>
    tpu.vector_store %arg9[%c0_46, %c0_47], %153 {strides = array<i32>} : memref<8x128xf32, #tpu.memory_space<vmem>>, vector<8x128xf32>,
    %c1_i32_48 = arith.constant 1 : i32
    %161 = arith.cmpi eq, %arg1, %c1_i32_48 : i32
    %162 = arith.extui %161 : i1 to i32
    %c0_i32_49 = arith.constant 0 : i32
    %163 = arith.cmpi ne, %162, %c0_i32_49 : i32
    scf.if %163 {
      %c0_50 = arith.constant 0 : index
      %c0_51 = arith.constant 0 : index
      %164 = vector.load %arg8[%c0_50, %c0_51] : memref<8x128xf32, #tpu.memory_space<vmem>>, vector<8x128xf32>
      tpu.vector_store %arg8[%c0_50, %c0_51], %153 {strides = array<i32>} : memref<8x128xf32, #tpu.memory_space<vmem>>, vector<8x128xf32>,
    } else {
    }
    return
  }
  func.func @transform_0(%arg0: i32, %arg1: i32) -> (i32, i32, i32) {
    %c0_i32 = arith.constant 0 : i32
    %c0_i32_0 = arith.constant 0 : i32
    return %arg1, %arg0, %c0_i32 : i32, i32, i32
  }
  func.func @transform_1(%arg0: i32, %arg1: i32) -> (i32, i32) {
    %c0_i32 = arith.constant 0 : i32
    %c0_i32_0 = arith.constant 0 : i32
    %c0_i32_1 = arith.constant 0 : i32
    return %c0_i32, %c0_i32_0 : i32, i32
  }
  func.func @transform_2(%arg0: i32, %arg1: i32) -> (i32, i32) {
    %c0_i32 = arith.constant 0 : i32
    %c0_i32_0 = arith.constant 0 : i32
    %c0_i32_1 = arith.constant 0 : i32
    return %c0_i32, %c0_i32_0 : i32, i32
  }
  func.func @transform_3(%arg0: i32, %arg1: i32) -> (i32, i32) {
    %c0_i32 = arith.constant 0 : i32
    %c0_i32_0 = arith.constant 0 : i32
    %c0_i32_1 = arith.constant 0 : i32
    return %c0_i32, %c0_i32_0 : i32, i32
  }
  func.func @transform_4(%arg0: i32, %arg1: i32) -> (i32, i32) {
    %c0_i32 = arith.constant 0 : i32
    %c0_i32_0 = arith.constant 0 : i32
    %c0_i32_1 = arith.constant 0 : i32
    return %c0_i32, %c0_i32_0 : i32, i32
  }
  func.func @transform_5(%arg0: i32, %arg1: i32) -> (i32, i32, i32) {
    %c0_i32 = arith.constant 0 : i32
    %c0_i32_0 = arith.constant 0 : i32
    return %arg1, %arg0, %c0_i32 : i32, i32, i32
  }
  func.func @transform_6(%arg0: i32, %arg1: i32) -> (i32, i32) {
    %c0_i32 = arith.constant 0 : i32
    %c0_i32_0 = arith.constant 0 : i32
    return %arg0, %c0_i32 : i32, i32
  }
}

</mosaic_0001>

<llo_original>
// kernel: tpu_custom_call.1
$region0: #{tpu_custom_call.1}
  #allocation0 [shape = 'u32[]', space=smem, size = 0x4, offset = 0x4, fixed_abs, tag = 'smem constant byte address 0x4 - core index']
  #allocation1 [shape = 'u32[144,128]{1,0:T(1,128)}', space=vmem, size = 0x12000, scoped, tag = 'internal scratch']
  #allocation2 [shape = 'f32[8,128]{1,0:T(8,128)}', space=vmem, size = 0x1000, scoped, tag = 'scratch operand']
  %s0 = inlined_call_operand.hbm [shape: f32[8,8,384], index: 0, kind: input, shape index: {}]
  %s1 = inlined_call_operand.hbm [shape: f32[128,384], index: 1, kind: input, shape index: {}]
  %s2 = inlined_call_operand.vmem [shape: f32[1,128], index: 2, kind: input, shape index: {}]
  %s3 = inlined_call_operand.hbm [shape: f32[128,384], index: 3, kind: input, shape index: {}]
  %s4 = inlined_call_operand.vmem [shape: f32[1,384], index: 4, kind: input, shape index: {}]
  %s5 = inlined_call_operand.hbm [shape: f32[8,8,384], index: 5, kind: output, shape index: {0}]
  %s6 = inlined_call_operand.hbm [shape: f32[8,128], index: 6, kind: output, shape index: {1}]
  %7 = xla_tuple %s5, %s6
  %s8 = sld [smem:[#allocation0]]
  $region81: #{tpu_custom_call.1} parent=0
    _
  %s10 = ssub.s32 1, %s8
  %s11 = scalar_select 0, %s10, %s8
  $region1: #{tpu_custom_call.1} parent=0
    #allocation3 [shape = 'u8[98304]{0}', space=vmem, size = 0x18000, scoped, tag = 'input window, operand 0']
    #allocation4 [shape = 's32[2]{0}', space=sflag, size = 0x8, scoped, tag = 'scoped memory for tpu_custom_call.1']
    #allocation5 [shape = 's32[2]{0}', space=sflag, size = 0x8, scoped, tag = 'scoped memory for tpu_custom_call.1']
    #allocation6 [shape = 'u8[196608]{0}', space=vmem, size = 0x30000, scoped, tag = 'input window, operand 1, single buffered']
    #allocation7 [shape = 's32[1]{0}', space=sflag, size = 0x4, scoped, tag = 'scoped memory for tpu_custom_call.1']
    #allocation8 [shape = 'u8[196608]{0}', space=vmem, size = 0x30000, scoped, tag = 'input window, operand 3, single buffered']
    #allocation9 [shape = 'u8[98304]{0}', space=vmem, size = 0x18000, scoped, tag = 'output window, operand 0']
    #allocation10 [shape = 'u8[4096]{0}', space=vmem, size = 0x1000, scoped, tag = 'output window, operand 1, single buffered']
    #allocation11 [shape = 's32[1]{0}', space=sflag, size = 0x4, scoped, tag = 'scoped memory for tpu_custom_call.1']
    %12 = vsyncpa [#allocation4], 0
    %s13 = scalar_lea.sflag [#allocation4], 1
    %14 = vsyncpa %s13, 0
    %15 = vsyncpa [#allocation7], 0
    %16 = vsyncpa [#allocation5], 0
    %s17 = scalar_lea.sflag [#allocation5], 1
    %18 = vsyncpa %s17, 0
    %19 = vsyncpa [#allocation11], 0
    loop: start=0, step=1, limit=4
    $region2: #{tpu_custom_call.1} parent=1 // loop_pre_header
      _
    $region3: #{tpu_custom_call.1} parent=1 // loop_header
      %s21 = sphi 0, %s25
      %p22 = scmp.ge.s32.totalorder %s21, 4
      %s28 = sphi 0, %s40
      %s29 = sphi 0, %s36
      %s30 = sphi 0, %s28
      %s31 = sphi 0, %s29
      %s32 = sphi 0, %s30
      %s33 = sphi 0, %s31
      %s45 = sphi 0, %s47
      %s48 = sphi 0, %s45
      %s49 = sphi 0, %s48
      %s65 = sphi 0, %s49
      %s69 = sphi 0, %s69
      %s71 = sphi 0, %s69
      %s72 = sphi 0, %s71
      %s86 = sphi 0, %s72
      %s90 = sphi 0, %s90
      %s92 = sphi 0, %s90
      %s93 = sphi 0, %s92
      %s107 = sphi 0, %s93
      %s111 = sphi 0, %s111
      %s113 = sphi 0, %s111
      %s114 = sphi 0, %s113
      %s128 = sphi 0, %s114
      %s132 = sphi 0, %s132
      %s134 = sphi 0, %s132
      %s135 = sphi 0, %s134
      %s149 = sphi 0, %s135
      %s157 = sphi 0, %s159
      %s160 = sphi 0, %s157
      %s161 = sphi 0, %s160
      %s177 = sphi 0, %s161
      %s183 = sphi 0, %s185
      %s186 = sphi 0, %s183
      %s187 = sphi 0, %s186
      %s203 = sphi 0, %s187
    $region4: #{tpu_custom_call.1} parent=1 // loop_header_branch
      %24 = sbr.rel (%p22) target = $region8
    $region5: #{tpu_custom_call.1} parent=1 // loop_body
      %s26 = ssub.s32 %s21, 1
      %s27 = ssub.s32 %s21, 2
      %s34 = sadd.s32 1, %s29
      %p35 = scmp.ge.s32.totalorder %s34, 2
      %s36 = scalar_select %p35, 0, %s34
      %s37 = sadd.s32 1, %s28
      %s38 = scalar_select %p35, %s37, %s28
      %p39 = scmp.ge.s32.totalorder %s38, 1
      %s40 = scalar_select %p39, 0, %s38
      %s41 = ssub.s32 %s29, %s36
      %s42 = ssub.s32 %s28, %s40
      %s43 = sor.u32 %s41, %s42
      %p44 = scmp.eq.s32.totalorder %s43, 0
      %s46 = sadd.s32 %s45, 1
      %s47 = scalar_select %p44, %s45, %s46
      %p50 = pneg %p44
      %p51 = scmp.eq.s32.totalorder %s21, 1
      %p52 = por %p50, %p51
      %p53 = scmp.ne.s32.totalorder %s45, %s48
      %p54 = scmp.eq.s32.totalorder %s21, 0
      %p55 = por %p53, %p54
      %p56 = scmp.ne.s32.totalorder %s45, %s48
      %p57 = scmp.eq.s32.totalorder %s26, 1
      %p58 = por %p56, %p57
      %p59 = scmp.ne.s32.totalorder %s48, %s49
      %p60 = scmp.eq.s32.totalorder %s26, 0
      %p61 = por %p59, %p60
      %p62 = scmp.ne.s32.totalorder %s48, %s49
      %p63 = scmp.eq.s32.totalorder %s27, 1
      %p64 = por %p62, %p63
      %p66 = scmp.ne.s32.totalorder %s49, %s65
      %p67 = scmp.eq.s32.totalorder %s27, 0
      %p68 = por %p66, %p67
      %s70 = sadd.s32 %s69, 1
      %p73 = scmp.eq.s32.totalorder %s21, 1
      %p74 = scmp.ne.s32.totalorder %s69, %s71
      %p75 = scmp.eq.s32.totalorder %s21, 0
      %p76 = por %p74, %p75
      %p77 = scmp.ne.s32.totalorder %s69, %s71
      %p78 = scmp.eq.s32.totalorder %s26, 1
      %p79 = por %p77, %p78
      %p80 = scmp.ne.s32.totalorder %s71, %s72
      %p81 = scmp.eq.s32.totalorder %s26, 0
      %p82 = por %p80, %p81
      %p83 = scmp.ne.s32.totalorder %s71, %s72
      %p84 = scmp.eq.s32.totalorder %s27, 1
      %p85 = por %p83, %p84
      %p87 = scmp.ne.s32.totalorder %s72, %s86
      %p88 = scmp.eq.s32.totalorder %s27, 0
      %p89 = por %p87, %p88
      %s91 = sadd.s32 %s90, 1
      %p94 = scmp.eq.s32.totalorder %s21, 1
      %p95 = scmp.ne.s32.totalorder %s90, %s92
      %p96 = scmp.eq.s32.totalorder %s21, 0
      %p97 = por %p95, %p96
      %p98 = scmp.ne.s32.totalorder %s90, %s92
      %p99 = scmp.eq.s32.totalorder %s26, 1
      %p100 = por %p98, %p99
      %p101 = scmp.ne.s32.totalorder %s92, %s93
      %p102 = scmp.eq.s32.totalorder %s26, 0
      %p103 = por %p101, %p102
      %p104 = scmp.ne.s32.totalorder %s92, %s93
      %p105 = scmp.eq.s32.totalorder %s27, 1
      %p106 = por %p104, %p105
      %p108 = scmp.ne.s32.totalorder %s93, %s107
      %p109 = scmp.eq.s32.totalorder %s27, 0
      %p110 = por %p108, %p109
      %s112 = sadd.s32 %s111, 1
      %p115 = scmp.eq.s32.totalorder %s21, 1
      %p116 = scmp.ne.s32.totalorder %s111, %s113
      %p117 = scmp.eq.s32.totalorder %s21, 0
      %p118 = por %p116, %p117
      %p119 = scmp.ne.s32.totalorder %s111, %s113
      %p120 = scmp.eq.s32.totalorder %s26, 1
      %p121 = por %p119, %p120
      %p122 = scmp.ne.s32.totalorder %s113, %s114
      %p123 = scmp.eq.s32.totalorder %s26, 0
      %p124 = por %p122, %p123
      %p125 = scmp.ne.s32.totalorder %s113, %s114
      %p126 = scmp.eq.s32.totalorder %s27, 1
      %p127 = por %p125, %p126
      %p129 = scmp.ne.s32.totalorder %s114, %s128
      %p130 = scmp.eq.s32.totalorder %s27, 0
      %p131 = por %p129, %p130
      %s133 = sadd.s32 %s132, 1
      %p136 = scmp.eq.s32.totalorder %s21, 1
      %p137 = scmp.ne.s32.totalorder %s132, %s134
      %p138 = scmp.eq.s32.totalorder %s21, 0
      %p139 = por %p137, %p138
      %p140 = scmp.ne.s32.totalorder %s132, %s134
      %p141 = scmp.eq.s32.totalorder %s26, 1
      %p142 = por %p140, %p141
      %p143 = scmp.ne.s32.totalorder %s134, %s135
      %p144 = scmp.eq.s32.totalorder %s26, 0
      %p145 = por %p143, %p144
      %p146 = scmp.ne.s32.totalorder %s134, %s135
      %p147 = scmp.eq.s32.totalorder %s27, 1
      %p148 = por %p146, %p147
      %p150 = scmp.ne.s32.totalorder %s135, %s149
      %p151 = scmp.eq.s32.totalorder %s27, 0
      %p152 = por %p150, %p151
      %s153 = ssub.s32 %s29, %s36
      %s154 = ssub.s32 %s28, %s40
      %s155 = sor.u32 %s153, %s154
      %p156 = scmp.eq.s32.totalorder %s155, 0
      %s158 = sadd.s32 %s157, 1
      %s159 = scalar_select %p156, %s157, %s158
      %p162 = pneg %p156
      %p163 = scmp.eq.s32.totalorder %s21, 1
      %p164 = por %p162, %p163
      %p165 = scmp.ne.s32.totalorder %s157, %s160
      %p166 = scmp.eq.s32.totalorder %s21, 0
      %p167 = por %p165, %p166
      %p168 = scmp.ne.s32.totalorder %s157, %s160
      %p169 = scmp.eq.s32.totalorder %s26, 1
      %p170 = por %p168, %p169
      %p171 = scmp.ne.s32.totalorder %s160, %s161
      %p172 = scmp.eq.s32.totalorder %s26, 0
      %p173 = por %p171, %p172
      %p174 = scmp.ne.s32.totalorder %s160, %s161
      %p175 = scmp.eq.s32.totalorder %s27, 1
      %p176 = por %p174, %p175
      %p178 = scmp.ne.s32.totalorder %s161, %s177
      %p179 = scmp.eq.s32.totalorder %s27, 0
      %p180 = por %p178, %p179
      %s181 = ssub.s32 %s28, %s40
      %p182 = scmp.eq.s32.totalorder %s181, 0
      %s184 = sadd.s32 %s183, 1
      %s185 = scalar_select %p182, %s183, %s184
      %p188 = pneg %p182
      %p189 = scmp.eq.s32.totalorder %s21, 1
      %p190 = por %p188, %p189
      %p191 = scmp.ne.s32.totalorder %s183, %s186
      %p192 = scmp.eq.s32.totalorder %s21, 0
      %p193 = por %p191, %p192
      %p194 = scmp.ne.s32.totalorder %s183, %s186
      %p195 = scmp.eq.s32.totalorder %s26, 1
      %p196 = por %p194, %p195
      %p197 = scmp.ne.s32.totalorder %s186, %s187
      %p198 = scmp.eq.s32.totalorder %s26, 0
      %p199 = por %p197, %p198
      %p200 = scmp.ne.s32.totalorder %s186, %s187
      %p201 = scmp.eq.s32.totalorder %s27, 1
      %p202 = por %p200, %p201
      %p204 = scmp.ne.s32.totalorder %s187, %s203
      %p205 = scmp.eq.s32.totalorder %s27, 0
      %p206 = por %p204, %p205
      %p207 = scmp.le.s32.totalorder 1, %s21
      %p208 = scmp.lt.s32.totalorder %s21, 3
      %p209 = pnand %p207, %p208
      %p210 = pneg %p209
      // Predicated region
      $region9: #{tpu_custom_call.1} parent=5 // pred_check
        _
      $region10: #{tpu_custom_call.1} parent=5 // pred_check_branch
        %212 = sbr.rel (%p209) target = $region12
      $region11: #{tpu_custom_call.1} parent=5 // pred_region
        %s213 = ssub.s32 %s21, 1
        // Predicated region
        $region13: #{tpu_custom_call.1} parent=11 // pred_check
          %p214 = pneg %p82
        $region14: #{tpu_custom_call.1} parent=11 // pred_check_branch
          %216 = sbr.rel (%p214) target = $region16
        $region15: #{tpu_custom_call.1} parent=11 // pred_region
          %s218 = ssub.s32 6144, 6144
          %219 = vsyncadd [#allocation7], %s218
          %s220 = sshll.u32 [#allocation6], 4
          %s221 = int_to_ptr.vmem [resolvable:$true] %s220
          %226 = dma.hbm_to_vmem [thread:$0]  %s1, 6144, %s221, [#allocation7], 384, 384, 24
        $region16: #{tpu_custom_call.1} parent=11 // pred_fallthru
          _
        // Predicated region
        $region17: #{tpu_custom_call.1} parent=11 // pred_check
          %p227 = pneg %p103
        $region18: #{tpu_custom_call.1} parent=11 // pred_check_branch
          %229 = sbr.rel (%p227) target = $region20
        $region19: #{tpu_custom_call.1} parent=11 // pred_region
          _
        $region20: #{tpu_custom_call.1} parent=11 // pred_fallthru
          _
        // Predicated region
        $region21: #{tpu_custom_call.1} parent=11 // pred_check
          %p230 = pneg %p124
        $region22: #{tpu_custom_call.1} parent=11 // pred_check_branch
          %232 = sbr.rel (%p230) target = $region24
        $region23: #{tpu_custom_call.1} parent=11 // pred_region
          %s234 = ssub.s32 6144, 6144
          %235 = vsyncadd [#allocation7], %s234
          %s236 = sshll.u32 [#allocation8], 4
          %s237 = int_to_ptr.vmem [resolvable:$true] %s236
          %242 = dma.hbm_to_vmem [thread:$0]  %s3, 6144, %s237, [#allocation7], 384, 384, 24
        $region24: #{tpu_custom_call.1} parent=11 // pred_fallthru
          _
        // Predicated region
        $region25: #{tpu_custom_call.1} parent=11 // pred_check
          %p243 = pneg %p145
        $region26: #{tpu_custom_call.1} parent=11 // pred_check_branch
          %245 = sbr.rel (%p243) target = $region28
        $region27: #{tpu_custom_call.1} parent=11 // pred_region
          _
        $region28: #{tpu_custom_call.1} parent=11 // pred_fallthru
          _
      $region12: #{tpu_custom_call.1} parent=5 // pred_fallthru
        _
      %p246 = scmp.lt.s32.totalorder %s21, 2
      // Predicated region
      $region29: #{tpu_custom_call.1} parent=5 // pred_check
        %p247 = pneg %p246
      $region30: #{tpu_custom_call.1} parent=5 // pred_check_branch
        %249 = sbr.rel (%p247) target = $region32
      $region31: #{tpu_custom_call.1} parent=5 // pred_region
        // Predicated region
        $region33: #{tpu_custom_call.1} parent=31 // pred_check
          %p250 = pneg %p55
        $region34: #{tpu_custom_call.1} parent=31 // pred_check_branch
          %252 = sbr.rel (%p250) target = $region36
        $region35: #{tpu_custom_call.1} parent=31 // pred_region
          %s253 = sand.u32 %s45, 1
          %s254 = scalar_lea.sflag [#allocation4], %s253
          %s255 = sand.u32 %s45, 1
          %s256 = smul.addr %s255, 96
          %s257 = scalar_lea.vmem [#allocation3], %s256
          %s258 = smul.u32 4, %s29
          %s260 = ssub.s32 1536, 1536
          %261 = vsyncadd %s254, %s260
          %s262 = smul.addr %s28, 3
          %s263 = smul.addr %s258, 3
          %s264 = sadd.s32 %s262, %s263
          %s265 = smul.addr %s264, 128
          %s266 = scalar_lea.hbm %s0, %s265
          %s267 = sshll.u32 %s257, 4
          %s268 = int_to_ptr.vmem [resolvable:$true] %s267
          %273 = dma.hbm_to_vmem [thread:$0]  %s266, 1536, %s268, %s254, 384, 384, 24
        $region36: #{tpu_custom_call.1} parent=31 // pred_fallthru
          _
      $region32: #{tpu_custom_call.1} parent=5 // pred_fallthru
        _
      %p274 = scmp.le.s32.totalorder 1, %s21
      %p275 = scmp.lt.s32.totalorder %s21, 3
      %p276 = pnand %p274, %p275
      %p277 = pneg %p276
      // Predicated region
      $region37: #{tpu_custom_call.1} parent=5 // pred_check
        _
      $region38: #{tpu_custom_call.1} parent=5 // pred_check_branch
        %279 = sbr.rel (%p276) target = $region40
      $region39: #{tpu_custom_call.1} parent=5 // pred_region
        %s280 = ssub.s32 %s21, 1
        %s281 = sand.u32 %s48, 1
        %s282 = scalar_lea.sflag [#allocation4], %s281
        %s283 = sand.u32 %s48, 1
        %s284 = smul.addr %s283, 96
        %s285 = scalar_lea.vmem [#allocation3], %s284
        // Predicated region
        $region41: #{tpu_custom_call.1} parent=39 // pred_check
          %p286 = pneg %p61
        $region42: #{tpu_custom_call.1} parent=39 // pred_check_branch
          %288 = sbr.rel (%p286) target = $region44
        $region43: #{tpu_custom_call.1} parent=39 // pred_region
          %289 = dma.done %s282, 1536
        $region44: #{tpu_custom_call.1} parent=39 // pred_fallthru
          _
        // Predicated region
        $region45: #{tpu_custom_call.1} parent=39 // pred_check
          %p290 = pneg %p82
        $region46: #{tpu_custom_call.1} parent=39 // pred_check_branch
          %292 = sbr.rel (%p290) target = $region48
        $region47: #{tpu_custom_call.1} parent=39 // pred_region
          %293 = dma.done [#allocation7], 6144
        $region48: #{tpu_custom_call.1} parent=39 // pred_fallthru
          _
        // Predicated region
        $region49: #{tpu_custom_call.1} parent=39 // pred_check
          %p294 = pneg %p124
        $region50: #{tpu_custom_call.1} parent=39 // pred_check_branch
          %296 = sbr.rel (%p294) target = $region52
        $region51: #{tpu_custom_call.1} parent=39 // pred_region
          %297 = dma.done [#allocation7], 6144
        $region52: #{tpu_custom_call.1} parent=39 // pred_fallthru
          _
        %s298 = sand.u32 %s48, 1
        %s299 = scalar_lea.sflag [#allocation4], %s298
        %s300 = sand.u32 %s48, 1
        %s301 = smul.addr %s300, 96
        %s302 = scalar_lea.vmem [#allocation3], %s301
        %p303 = pneg %p61
        %p304 = pneg %p58
        %p305 = pneg %p82
        %p306 = pneg %p79
        %p307 = pneg %p103
        %p308 = pneg %p100
        %p309 = pneg %p124
        %p310 = pneg %p121
        %p311 = pneg %p145
        %p312 = pneg %p142
        %p313 = pneg %p173
        %p314 = pneg %p170
        %s315 = sand.u32 %s160, 1
        %s316 = scalar_lea.sflag [#allocation5], %s315
        %s317 = sand.u32 %s160, 1
        %s318 = smul.addr %s317, 96
        %s319 = scalar_lea.vmem [#allocation9], %s318
        %p320 = pneg %p199
        %p321 = pneg %p196
        %s322 = smul.u32 4, %s31
        %s323 = smul.u32 4, %s31
        %p324 = scmp.eq.s32.totalorder %s31, 0
        // Predicated region
        $region53: #{tpu_custom_call.1} parent=39 // pred_check
          %p325 = pneg %p324
        $region54: #{tpu_custom_call.1} parent=39 // pred_check_branch
          %327 = sbr.rel (%p325) target = $region56
        $region55: #{tpu_custom_call.1} parent=39 // pred_region
          %328 = vst [vmem:[#allocation2] sm:$0xff] 0.0
        $region56: #{tpu_custom_call.1} parent=39 // pred_fallthru
          _
        %v329 = vld [vmem:[#allocation6] sm:$0xff]
        %v330 = vld [vmem:[#allocation6 + $0x8] sm:$0xff]
        %v331 = vld [vmem:[#allocation6 + $0x10] sm:$0xff]
        %v332 = vld [vmem:[#allocation6 + $0x18] sm:$0xff]
        %v333 = vld [vmem:[#allocation6 + $0x20] sm:$0xff]
        %v334 = vld [vmem:[#allocation6 + $0x28] sm:$0xff]
        %v335 = vld [vmem:[#allocation6 + $0x30] sm:$0xff]
        %v336 = vld [vmem:[#allocation6 + $0x38] sm:$0xff]
        %v337 = vld [vmem:[#allocation6 + $0x40] sm:$0xff]
        %v338 = vld [vmem:[#allocation6 + $0x48] sm:$0xff]
        %v339 = vld [vmem:[#allocation6 + $0x50] sm:$0xff]
        %v340 = vld [vmem:[#allocation6 + $0x58] sm:$0xff]
        %v341 = vld [vmem:[#allocation6 + $0x60] sm:$0xff]
        %v342 = vld [vmem:[#allocation6 + $0x68] sm:$0xff]
        %v343 = vld [vmem:[#allocation6 + $0x70] sm:$0xff]
        %v344 = vld [vmem:[#allocation6 + $0x78] sm:$0xff]
        %v345 = vld [vmem:[#allocation6 + $0x80] sm:$0xff]
        %v346 = vld [vmem:[#allocation6 + $0x88] sm:$0xff]
        %v347 = vld [vmem:[#allocation6 + $0x90] sm:$0xff]
        %v348 = vld [vmem:[#allocation6 + $0x98] sm:$0xff]
        %v349 = vld [vmem:[#allocation6 + $0xa0] sm:$0xff]
        %v350 = vld [vmem:[#allocation6 + $0xa8] sm:$0xff]
        %v351 = vld [vmem:[#allocation6 + $0xb0] sm:$0xff]
        %v352 = vld [vmem:[#allocation6 + $0xb8] sm:$0xff]
        %v353 = vld [vmem:[#allocation6 + $0xc0] sm:$0xff]
        %v354 = vld [vmem:[#allocation6 + $0xc8] sm:$0xff]
        %v355 = vld [vmem:[#allocation6 + $0xd0] sm:$0xff]
        %v356 = vld [vmem:[#allocation6 + $0xd8] sm:$0xff]
        %v357 = vld [vmem:[#allocation6 + $0xe0] sm:$0xff]
        %v358 = vld [vmem:[#allocation6 + $0xe8] sm:$0xff]
        %v359 = vld [vmem:[#allocation6 + $0xf0] sm:$0xff]
        %v360 = vld [vmem:[#allocation6 + $0xf8] sm:$0xff]
        %v361 = vld [vmem:[#allocation6 + $0x100] sm:$0xff]
        %v362 = vld [vmem:[#allocation6 + $0x108] sm:$0xff]
        %v363 = vld [vmem:[#allocation6 + $0x110] sm:$0xff]
        %v364 = vld [vmem:[#allocation6 + $0x118] sm:$0xff]
        %v365 = vld [vmem:[#allocation6 + $0x120] sm:$0xff]
        %v366 = vld [vmem:[#allocation6 + $0x128] sm:$0xff]
        %v367 = vld [vmem:[#allocation6 + $0x130] sm:$0xff]
        %v368 = vld [vmem:[#allocation6 + $0x138] sm:$0xff]
        %v369 = vld [vmem:[#allocation6 + $0x140] sm:$0xff]
        %v370 = vld [vmem:[#allocation6 + $0x148] sm:$0xff]
        %v371 = vld [vmem:[#allocation6 + $0x150] sm:$0xff]
        %v372 = vld [vmem:[#allocation6 + $0x158] sm:$0xff]
        %v373 = vld [vmem:[#allocation6 + $0x160] sm:$0xff]
        %v374 = vld [vmem:[#allocation6 + $0x168] sm:$0xff]
        %v375 = vld [vmem:[#allocation6 + $0x170] sm:$0xff]
        %v376 = vld [vmem:[#allocation6 + $0x178] sm:$0xff]
        %v377 = vld [vmem:[%s2] sm:$0x1]
        %v379 = vlaneseq
        %v380 = vshrl.u32 %v379, 7
        %v381 = vsub.s32 0, %v380
        %v382 = vrot.slane %v377, %v381
        %v384 = vld [vmem:[#allocation8] sm:$0xff]
        %v385 = vld [vmem:[#allocation8 + $0x8] sm:$0xff]
        %v386 = vld [vmem:[#allocation8 + $0x10] sm:$0xff]
        %v387 = vld [vmem:[#allocation8 + $0x18] sm:$0xff]
        %v388 = vld [vmem:[#allocation8 + $0x20] sm:$0xff]
        %v389 = vld [vmem:[#allocation8 + $0x28] sm:$0xff]
        %v390 = vld [vmem:[#allocation8 + $0x30] sm:$0xff]
        %v391 = vld [vmem:[#allocation8 + $0x38] sm:$0xff]
        %v392 = vld [vmem:[#allocation8 + $0x40] sm:$0xff]
        %v393 = vld [vmem:[#allocation8 + $0x48] sm:$0xff]
        %v394 = vld [vmem:[#allocation8 + $0x50] sm:$0xff]
        %v395 = vld [vmem:[#allocation8 + $0x58] sm:$0xff]
        %v396 = vld [vmem:[#allocation8 + $0x60] sm:$0xff]
        %v397 = vld [vmem:[#allocation8 + $0x68] sm:$0xff]
        %v398 = vld [vmem:[#allocation8 + $0x70] sm:$0xff]
        %v399 = vld [vmem:[#allocation8 + $0x78] sm:$0xff]
        %v400 = vld [vmem:[#allocation8 + $0x80] sm:$0xff]
        %v401 = vld [vmem:[#allocation8 + $0x88] sm:$0xff]
        %v402 = vld [vmem:[#allocation8 + $0x90] sm:$0xff]
        %v403 = vld [vmem:[#allocation8 + $0x98] sm:$0xff]
        %v404 = vld [vmem:[#allocation8 + $0xa0] sm:$0xff]
        %v405 = vld [vmem:[#allocation8 + $0xa8] sm:$0xff]
        %v406 = vld [vmem:[#allocation8 + $0xb0] sm:$0xff]
        %v407 = vld [vmem:[#allocation8 + $0xb8] sm:$0xff]
        %v408 = vld [vmem:[#allocation8 + $0xc0] sm:$0xff]
        %v409 = vld [vmem:[#allocation8 + $0xc8] sm:$0xff]
        %v410 = vld [vmem:[#allocation8 + $0xd0] sm:$0xff]
        %v411 = vld [vmem:[#allocation8 + $0xd8] sm:$0xff]
        %v412 = vld [vmem:[#allocation8 + $0xe0] sm:$0xff]
        %v413 = vld [vmem:[#allocation8 + $0xe8] sm:$0xff]
        %v414 = vld [vmem:[#allocation8 + $0xf0] sm:$0xff]
        %v415 = vld [vmem:[#allocation8 + $0xf8] sm:$0xff]
        %v416 = vld [vmem:[#allocation8 + $0x100] sm:$0xff]
        %v417 = vld [vmem:[#allocation8 + $0x108] sm:$0xff]
        %v418 = vld [vmem:[#allocation8 + $0x110] sm:$0xff]
        %v419 = vld [vmem:[#allocation8 + $0x118] sm:$0xff]
        %v420 = vld [vmem:[#allocation8 + $0x120] sm:$0xff]
        %v421 = vld [vmem:[#allocation8 + $0x128] sm:$0xff]
        %v422 = vld [vmem:[#allocation8 + $0x130] sm:$0xff]
        %v423 = vld [vmem:[#allocation8 + $0x138] sm:$0xff]
        %v424 = vld [vmem:[#allocation8 + $0x140] sm:$0xff]
        %v425 = vld [vmem:[#allocation8 + $0x148] sm:$0xff]
        %v426 = vld [vmem:[#allocation8 + $0x150] sm:$0xff]
        %v427 = vld [vmem:[#allocation8 + $0x158] sm:$0xff]
        %v428 = vld [vmem:[#allocation8 + $0x160] sm:$0xff]
        %v429 = vld [vmem:[#allocation8 + $0x168] sm:$0xff]
        %v430 = vld [vmem:[#allocation8 + $0x170] sm:$0xff]
        %v431 = vld [vmem:[#allocation8 + $0x178] sm:$0xff]
        %v432 = vld [vmem:[%s4] sm:$0x7]
        %v434 = vlaneseq
        %v435 = vshrl.u32 %v434, 7
        %v436 = vsub.s32 0, %v435
        %v437 = vrot.slane %v432, %v436
        %v438 = vlaneseq
        %v439 = vshrl.u32 %v438, 7
        %v440 = vsub.s32 1, %v439
        %v441 = vrot.slane %v432, %v440
        %v442 = vlaneseq
        %v443 = vshrl.u32 %v442, 7
        %v444 = vsub.s32 2, %v443
        %v445 = vrot.slane %v432, %v444
        %v449 = vld [vmem:[#allocation2] sm:$0xff]
        %v450 = vld [vmem:[%s285] sm:$0xff]
        %v451 = vld [vmem:[%s285 + $0x8] sm:$0xff]
        %v452 = vld [vmem:[%s285 + $0x10] sm:$0xff]
        %453 = vmatprep.subr.mxu0 %v330
        %454 = vmatpush1.msra.mxu0 %v329
        %455 = vmatprep.subr.mxu0 %v333
        %456 = vmatpush1.msra.mxu0 %v332
        %457 = vmatprep.subr.mxu0 %v336
        %458 = vmatpush1.msra.mxu0 %v335
        %459 = vmatprep.subr.mxu0 %v339
        %460 = vmatpush1.msra.mxu0 %v338
        %461 = vmatprep.subr.mxu0 %v342
        %462 = vmatpush1.msra.mxu0 %v341
        %463 = vmatprep.subr.mxu0 %v345
        %464 = vmatpush1.msra.mxu0 %v344
        %465 = vmatprep.subr.mxu0 %v348
        %466 = vmatpush1.msra.mxu0 %v347
        %467 = vmatprep.subr.mxu0 %v351
        %468 = vmatpush1.msra.mxu0 %v350
        %469 = vmatprep.subr.mxu0 %v354
        %470 = vmatpush1.msra.mxu0 %v353
        %471 = vmatprep.subr.mxu0 %v357
        %472 = vmatpush1.msra.mxu0 %v356
        %473 = vmatprep.subr.mxu0 %v360
        %474 = vmatpush1.msra.mxu0 %v359
        %475 = vmatprep.subr.mxu0 %v363
        %476 = vmatpush1.msra.mxu0 %v362
        %477 = vmatprep.subr.mxu0 %v366
        %478 = vmatpush1.msra.mxu0 %v365
        %479 = vmatprep.subr.mxu0 %v369
        %480 = vmatpush1.msra.mxu0 %v368
        %481 = vmatprep.subr.mxu0 %v372
        %482 = vmatpush1.msra.mxu0 %v371
        %483 = vmatprep.subr.mxu0 %v375
        %484 = vmatpush1.msra.mxu0 %v374
        %485 = vmatprep.subr.mxu0 0.0
        %486 = vmatpush1.msra.mxu0 0.0
        %487 = vmatprep.subr.mxu0 0.0
        %488 = vmatpush1.msra.mxu0 0.0
        %489 = vmatprep.subr.mxu0 0.0
        %490 = vmatpush1.msra.mxu0 0.0
        %491 = vmatprep.subr.mxu0 0.0
        %492 = vmatpush1.msra.mxu0 0.0
        %493 = vmatprep.subr.mxu0 0.0
        %494 = vmatpush1.msra.mxu0 0.0
        %495 = vmatprep.subr.mxu0 0.0
        %496 = vmatpush1.msra.mxu0 0.0
        %497 = vmatprep.subr.mxu0 0.0
        %498 = vmatpush1.msra.mxu0 0.0
        %499 = vmatprep.subr.mxu0 0.0
        %500 = vmatpush1.msra.mxu0 0.0
        %501 = vmatprep.subr.mxu0 0.0
        %502 = vmatpush1.msra.mxu0 0.0
        %503 = vmatprep.subr.mxu0 0.0
        %504 = vmatpush1.msra.mxu0 0.0
        %505 = vmatprep.subr.mxu0 0.0
        %506 = vmatpush1.msra.mxu0 0.0
        %507 = vmatprep.subr.mxu0 0.0
        %508 = vmatpush1.msra.mxu0 0.0
        %509 = vmatprep.subr.mxu0 0.0
        %510 = vmatpush1.msra.mxu0 0.0
        %511 = vmatprep.subr.mxu0 0.0
        %512 = vmatpush1.msra.mxu0 0.0
        %513 = vmatprep.subr.mxu0 0.0
        %514 = vmatpush1.msra.mxu0 0.0
        %515 = vmatprep.subr.mxu0 0.0
        %516 = vmatpush1.msra.mxu0 0.0
        %517 = vmatprep.mubr.f32.mxu0 0.0
        %518 = vmatmul.mubr.f32.gmra.mrb[0].mxu0 %v449
        %v519 = vpop.f32.mrb[0].mxu0
        %v520 = vadd.f32 0.0, %v519
        %v521 = vpop.f32.mrb[0].mxu0
        %v522 = vadd.f32 0.0, %v521
        %523 = vdwg.mxu0
        %524 = vmatprep.subr.mxu0 0.0
        %525 = vmatpush1.msra.mxu0 %v331
        %526 = vmatprep.subr.mxu0 0.0
        %527 = vmatpush1.msra.mxu0 %v334
        %528 = vmatprep.subr.mxu0 0.0
        %529 = vmatpush1.msra.mxu0 %v337
        %530 = vmatprep.subr.mxu0 0.0
        %531 = vmatpush1.msra.mxu0 %v340
        %532 = vmatprep.subr.mxu0 0.0
        %533 = vmatpush1.msra.mxu0 %v343
        %534 = vmatprep.subr.mxu0 0.0
        %535 = vmatpush1.msra.mxu0 %v346
        %536 = vmatprep.subr.mxu0 0.0
        %537 = vmatpush1.msra.mxu0 %v349
        %538 = vmatprep.subr.mxu0 0.0
        %539 = vmatpush1.msra.mxu0 %v352
        %540 = vmatprep.subr.mxu0 0.0
        %541 = vmatpush1.msra.mxu0 %v355
        %542 = vmatprep.subr.mxu0 0.0
        %543 = vmatpush1.msra.mxu0 %v358
        %544 = vmatprep.subr.mxu0 0.0
        %545 = vmatpush1.msra.mxu0 %v361
        %546 = vmatprep.subr.mxu0 0.0
        %547 = vmatpush1.msra.mxu0 %v364
        %548 = vmatprep.subr.mxu0 0.0
        %549 = vmatpush1.msra.mxu0 %v367
        %550 = vmatprep.subr.mxu0 0.0
        %551 = vmatpush1.msra.mxu0 %v370
        %552 = vmatprep.subr.mxu0 0.0
        %553 = vmatpush1.msra.mxu0 %v373
        %554 = vmatprep.subr.mxu0 0.0
        %555 = vmatpush1.msra.mxu0 %v376
        %556 = vmatprep.subr.mxu0 0.0
        %557 = vmatpush1.msra.mxu0 0.0
        %558 = vmatprep.subr.mxu0 0.0
        %559 = vmatpush1.msra.mxu0 0.0
        %560 = vmatprep.subr.mxu0 0.0
        %561 = vmatpush1.msra.mxu0 0.0
        %562 = vmatprep.subr.mxu0 0.0
        %563 = vmatpush1.msra.mxu0 0.0
        %564 = vmatprep.subr.mxu0 0.0
        %565 = vmatpush1.msra.mxu0 0.0
        %566 = vmatprep.subr.mxu0 0.0
        %567 = vmatpush1.msra.mxu0 0.0
        %568 = vmatprep.subr.mxu0 0.0
        %569 = vmatpush1.msra.mxu0 0.0
        %570 = vmatprep.subr.mxu0 0.0
        %571 = vmatpush1.msra.mxu0 0.0
        %572 = vmatprep.subr.mxu0 0.0
        %573 = vmatpush1.msra.mxu0 0.0
        %574 = vmatprep.subr.mxu0 0.0
        %575 = vmatpush1.msra.mxu0 0.0
        %576 = vmatprep.subr.mxu0 0.0
        %577 = vmatpush1.msra.mxu0 0.0
        %578 = vmatprep.subr.mxu0 0.0
        %579 = vmatpush1.msra.mxu0 0.0
        %580 = vmatprep.subr.mxu0 0.0
        %581 = vmatpush1.msra.mxu0 0.0
        %582 = vmatprep.subr.mxu0 0.0
        %583 = vmatpush1.msra.mxu0 0.0
        %584 = vmatprep.subr.mxu0 0.0
        %585 = vmatpush1.msra.mxu0 0.0
        %586 = vmatprep.subr.mxu0 0.0
        %587 = vmatpush1.msra.mxu0 0.0
        %588 = vmatprep.mubr.f32.mxu0 0.0
        %589 = vmatmul.mubr.f32.gmra.mrb[0].mxu0 %v449
        %v590 = vpop.f32.mrb[0].mxu0
        %v591 = vadd.f32 0.0, %v590
        %v592 = vpop.f32.mrb[0].mxu0
        %593 = vdwg.mxu0
        %v594 = vadd.f32 %v450, %v520
        %v595 = vxor.u32 %v594, 2147483648
        %v596 = vmul.f32 %v595, 1.442695
        %v597 = vpow.pop %v596
        %v598 = vadd.f32 %v597, 1.0
        %v599 = vrcp.pop %v598
        %v600 = vmul.f32 1.0, %v599
        %v601 = vadd.f32 %v451, %v522
        %v602 = vxor.u32 %v601, 2147483648
        %v603 = vmul.f32 %v602, 1.442695
        %v604 = vpow.pop %v603
        %v605 = vadd.f32 %v604, 1.0
        %v606 = vrcp.pop %v605
        %v607 = vmul.f32 1.0, %v606
        %v608 = vadd.f32 %v591, %v382
        %v609 = vmul.f32 %v600, %v608
        %v610 = vadd.f32 %v452, %v609
        %v611 = vtanh.pop %v610
        %v612 = vsub.f32 1.0, %v607
        %v613 = vmul.f32 %v612, %v611
        %v614 = vmul.f32 %v607, %v449
        %v615 = vadd.f32 %v613, %v614
        %616 = vmatprep.subr.mxu0 %v385
        %617 = vmatpush1.msra.mxu0 %v384
        %618 = vmatprep.subr.mxu0 %v388
        %619 = vmatpush1.msra.mxu0 %v387
        %620 = vmatprep.subr.mxu0 %v391
        %621 = vmatpush1.msra.mxu0 %v390
        %622 = vmatprep.subr.mxu0 %v394
        %623 = vmatpush1.msra.mxu0 %v393
        %624 = vmatprep.subr.mxu0 %v397
        %625 = vmatpush1.msra.mxu0 %v396
        %626 = vmatprep.subr.mxu0 %v400
        %627 = vmatpush1.msra.mxu0 %v399
        %628 = vmatprep.subr.mxu0 %v403
        %629 = vmatpush1.msra.mxu0 %v402
        %630 = vmatprep.subr.mxu0 %v406
        %631 = vmatpush1.msra.mxu0 %v405
        %632 = vmatprep.subr.mxu0 %v409
        %633 = vmatpush1.msra.mxu0 %v408
        %634 = vmatprep.subr.mxu0 %v412
        %635 = vmatpush1.msra.mxu0 %v411
        %636 = vmatprep.subr.mxu0 %v415
        %637 = vmatpush1.msra.mxu0 %v414
        %638 = vmatprep.subr.mxu0 %v418
        %639 = vmatpush1.msra.mxu0 %v417
        %640 = vmatprep.subr.mxu0 %v421
        %641 = vmatpush1.msra.mxu0 %v420
        %642 = vmatprep.subr.mxu0 %v424
        %643 = vmatpush1.msra.mxu0 %v423
        %644 = vmatprep.subr.mxu0 %v427
        %645 = vmatpush1.msra.mxu0 %v426
        %646 = vmatprep.subr.mxu0 %v430
        %647 = vmatpush1.msra.mxu0 %v429
        %648 = vmatprep.subr.mxu0 0.0
        %649 = vmatpush1.msra.mxu0 0.0
        %650 = vmatprep.subr.mxu0 0.0
        %651 = vmatpush1.msra.mxu0 0.0
        %652 = vmatprep.subr.mxu0 0.0
        %653 = vmatpush1.msra.mxu0 0.0
        %654 = vmatprep.subr.mxu0 0.0
        %655 = vmatpush1.msra.mxu0 0.0
        %656 = vmatprep.subr.mxu0 0.0
        %657 = vmatpush1.msra.mxu0 0.0
        %658 = vmatprep.subr.mxu0 0.0
        %659 = vmatpush1.msra.mxu0 0.0
        %660 = vmatprep.subr.mxu0 0.0
        %661 = vmatpush1.msra.mxu0 0.0
        %662 = vmatprep.subr.mxu0 0.0
        %663 = vmatpush1.msra.mxu0 0.0
        %664 = vmatprep.subr.mxu0 0.0
        %665 = vmatpush1.msra.mxu0 0.0
        %666 = vmatprep.subr.mxu0 0.0
        %667 = vmatpush1.msra.mxu0 0.0
        %668 = vmatprep.subr.mxu0 0.0
        %669 = vmatpush1.msra.mxu0 0.0
        %670 = vmatprep.subr.mxu0 0.0
        %671 = vmatpush1.msra.mxu0 0.0
        %672 = vmatprep.subr.mxu0 0.0
        %673 = vmatpush1.msra.mxu0 0.0
        %674 = vmatprep.subr.mxu0 0.0
        %675 = vmatpush1.msra.mxu0 0.0
        %676 = vmatprep.subr.mxu0 0.0
        %677 = vmatpush1.msra.mxu0 0.0
        %678 = vmatprep.subr.mxu0 0.0
        %679 = vmatpush1.msra.mxu0 0.0
        %680 = vmatprep.mubr.f32.mxu0 0.0
        %681 = vmatmul.mubr.f32.gmra.mrb[0].mxu0 %v615
        %v682 = vpop.f32.mrb[0].mxu0
        %v683 = vadd.f32 %v437, %v682
        %v684 = vpop.f32.mrb[0].mxu0
        %v685 = vadd.f32 %v441, %v684
        %686 = vdwg.mxu0
        %687 = vmatprep.subr.mxu0 0.0
        %688 = vmatpush1.msra.mxu0 %v386
        %689 = vmatprep.subr.mxu0 0.0
        %690 = vmatpush1.msra.mxu0 %v389
        %691 = vmatprep.subr.mxu0 0.0
        %692 = vmatpush1.msra.mxu0 %v392
        %693 = vmatprep.subr.mxu0 0.0
        %694 = vmatpush1.msra.mxu0 %v395
        %695 = vmatprep.subr.mxu0 0.0
        %696 = vmatpush1.msra.mxu0 %v398
        %697 = vmatprep.subr.mxu0 0.0
        %698 = vmatpush1.msra.mxu0 %v401
        %699 = vmatprep.subr.mxu0 0.0
        %700 = vmatpush1.msra.mxu0 %v404
        %701 = vmatprep.subr.mxu0 0.0
        %702 = vmatpush1.msra.mxu0 %v407
        %703 = vmatprep.subr.mxu0 0.0
        %704 = vmatpush1.msra.mxu0 %v410
        %705 = vmatprep.subr.mxu0 0.0
        %706 = vmatpush1.msra.mxu0 %v413
        %707 = vmatprep.subr.mxu0 0.0
        %708 = vmatpush1.msra.mxu0 %v416
        %709 = vmatprep.subr.mxu0 0.0
        %710 = vmatpush1.msra.mxu0 %v419
        %711 = vmatprep.subr.mxu0 0.0
        %712 = vmatpush1.msra.mxu0 %v422
        %713 = vmatprep.subr.mxu0 0.0
        %714 = vmatpush1.msra.mxu0 %v425
        %715 = vmatprep.subr.mxu0 0.0
        %716 = vmatpush1.msra.mxu0 %v428
        %717 = vmatprep.subr.mxu0 0.0
        %718 = vmatpush1.msra.mxu0 %v431
        %719 = vmatprep.subr.mxu0 0.0
        %720 = vmatpush1.msra.mxu0 0.0
        %721 = vmatprep.subr.mxu0 0.0
        %722 = vmatpush1.msra.mxu0 0.0
        %723 = vmatprep.subr.mxu0 0.0
        %724 = vmatpush1.msra.mxu0 0.0
        %725 = vmatprep.subr.mxu0 0.0
        %726 = vmatpush1.msra.mxu0 0.0
        %727 = vmatprep.subr.mxu0 0.0
        %728 = vmatpush1.msra.mxu0 0.0
        %729 = vmatprep.subr.mxu0 0.0
        %730 = vmatpush1.msra.mxu0 0.0
        %731 = vmatprep.subr.mxu0 0.0
        %732 = vmatpush1.msra.mxu0 0.0
        %733 = vmatprep.subr.mxu0 0.0
        %734 = vmatpush1.msra.mxu0 0.0
        %735 = vmatprep.subr.mxu0 0.0
        %736 = vmatpush1.msra.mxu0 0.0
        %737 = vmatprep.subr.mxu0 0.0
        %738 = vmatpush1.msra.mxu0 0.0
        %739 = vmatprep.subr.mxu0 0.0
        %740 = vmatpush1.msra.mxu0 0.0
        %741 = vmatprep.subr.mxu0 0.0
        %742 = vmatpush1.msra.mxu0 0.0
        %743 = vmatprep.subr.mxu0 0.0
        %744 = vmatpush1.msra.mxu0 0.0
        %745 = vmatprep.subr.mxu0 0.0
        %746 = vmatpush1.msra.mxu0 0.0
        %747 = vmatprep.subr.mxu0 0.0
        %748 = vmatpush1.msra.mxu0 0.0
        %749 = vmatprep.subr.mxu0 0.0
        %750 = vmatpush1.msra.mxu0 0.0
        %751 = vmatprep.mubr.f32.mxu0 0.0
        %752 = vmatmul.mubr.f32.gmra.mrb[0].mxu0 %v615
        %v753 = vpop.f32.mrb[0].mxu0
        %v754 = vadd.f32 %v445, %v753
        %v755 = vpop.f32.mrb[0].mxu0
        %756 = vdwg.mxu0
        %757 = vst [vmem:[%s319] sm:$0xff] %v683
        %758 = vst [vmem:[%s319 + $0x8] sm:$0xff] %v685
        %759 = vst [vmem:[%s319 + $0x10] sm:$0xff] %v754
        %s760 = scalar_lea.vmem %s285, 24 [#allocation3]
        %v761 = vld [vmem:[%s760] sm:$0xff]
        %v762 = vld [vmem:[%s760 + $0x8] sm:$0xff]
        %v763 = vld [vmem:[%s760 + $0x10] sm:$0xff]
        %764 = vmatprep.subr.mxu0 %v330
        %765 = vmatpush1.msra.mxu0 %v329
        %766 = vmatprep.subr.mxu0 %v333
        %767 = vmatpush1.msra.mxu0 %v332
        %768 = vmatprep.subr.mxu0 %v336
        %769 = vmatpush1.msra.mxu0 %v335
        %770 = vmatprep.subr.mxu0 %v339
        %771 = vmatpush1.msra.mxu0 %v338
        %772 = vmatprep.subr.mxu0 %v342
        %773 = vmatpush1.msra.mxu0 %v341
        %774 = vmatprep.subr.mxu0 %v345
        %775 = vmatpush1.msra.mxu0 %v344
        %776 = vmatprep.subr.mxu0 %v348
        %777 = vmatpush1.msra.mxu0 %v347
        %778 = vmatprep.subr.mxu0 %v351
        %779 = vmatpush1.msra.mxu0 %v350
        %780 = vmatprep.subr.mxu0 %v354
        %781 = vmatpush1.msra.mxu0 %v353
        %782 = vmatprep.subr.mxu0 %v357
        %783 = vmatpush1.msra.mxu0 %v356
        %784 = vmatprep.subr.mxu0 %v360
        %785 = vmatpush1.msra.mxu0 %v359
        %786 = vmatprep.subr.mxu0 %v363
        %787 = vmatpush1.msra.mxu0 %v362
        %788 = vmatprep.subr.mxu0 %v366
        %789 = vmatpush1.msra.mxu0 %v365
        %790 = vmatprep.subr.mxu0 %v369
        %791 = vmatpush1.msra.mxu0 %v368
        %792 = vmatprep.subr.mxu0 %v372
        %793 = vmatpush1.msra.mxu0 %v371
        %794 = vmatprep.subr.mxu0 %v375
        %795 = vmatpush1.msra.mxu0 %v374
        %796 = vmatprep.subr.mxu0 0.0
        %797 = vmatpush1.msra.mxu0 0.0
        %798 = vmatprep.subr.mxu0 0.0
        %799 = vmatpush1.msra.mxu0 0.0
        %800 = vmatprep.subr.mxu0 0.0
        %801 = vmatpush1.msra.mxu0 0.0
        %802 = vmatprep.subr.mxu0 0.0
        %803 = vmatpush1.msra.mxu0 0.0
        %804 = vmatprep.subr.mxu0 0.0
        %805 = vmatpush1.msra.mxu0 0.0
        %806 = vmatprep.subr.mxu0 0.0
        %807 = vmatpush1.msra.mxu0 0.0
        %808 = vmatprep.subr.mxu0 0.0
        %809 = vmatpush1.msra.mxu0 0.0
        %810 = vmatprep.subr.mxu0 0.0
        %811 = vmatpush1.msra.mxu0 0.0
        %812 = vmatprep.subr.mxu0 0.0
        %813 = vmatpush1.msra.mxu0 0.0
        %814 = vmatprep.subr.mxu0 0.0
        %815 = vmatpush1.msra.mxu0 0.0
        %816 = vmatprep.subr.mxu0 0.0
        %817 = vmatpush1.msra.mxu0 0.0
        %818 = vmatprep.subr.mxu0 0.0
        %819 = vmatpush1.msra.mxu0 0.0
        %820 = vmatprep.subr.mxu0 0.0
        %821 = vmatpush1.msra.mxu0 0.0
        %822 = vmatprep.subr.mxu0 0.0
        %823 = vmatpush1.msra.mxu0 0.0
        %824 = vmatprep.subr.mxu0 0.0
        %825 = vmatpush1.msra.mxu0 0.0
        %826 = vmatprep.subr.mxu0 0.0
        %827 = vmatpush1.msra.mxu0 0.0
        %828 = vmatprep.mubr.f32.mxu0 0.0
        %829 = vmatmul.mubr.f32.gmra.mrb[0].mxu0 %v615
        %v830 = vpop.f32.mrb[0].mxu0
        %v831 = vadd.f32 0.0, %v830
        %v832 = vpop.f32.mrb[0].mxu0
        %v833 = vadd.f32 0.0, %v832
        %834 = vdwg.mxu0
        %835 = vmatprep.subr.mxu0 0.0
        %836 = vmatpush1.msra.mxu0 %v331
        %837 = vmatprep.subr.mxu0 0.0
        %838 = vmatpush1.msra.mxu0 %v334
        %839 = vmatprep.subr.mxu0 0.0
        %840 = vmatpush1.msra.mxu0 %v337
        %841 = vmatprep.subr.mxu0 0.0
        %842 = vmatpush1.msra.mxu0 %v340
        %843 = vmatprep.subr.mxu0 0.0
        %844 = vmatpush1.msra.mxu0 %v343
        %845 = vmatprep.subr.mxu0 0.0
        %846 = vmatpush1.msra.mxu0 %v346
        %847 = vmatprep.subr.mxu0 0.0
        %848 = vmatpush1.msra.mxu0 %v349
        %849 = vmatprep.subr.mxu0 0.0
        %850 = vmatpush1.msra.mxu0 %v352
        %851 = vmatprep.subr.mxu0 0.0
        %852 = vmatpush1.msra.mxu0 %v355
        %853 = vmatprep.subr.mxu0 0.0
        %854 = vmatpush1.msra.mxu0 %v358
        %855 = vmatprep.subr.mxu0 0.0
        %856 = vmatpush1.msra.mxu0 %v361
        %857 = vmatprep.subr.mxu0 0.0
        %858 = vmatpush1.msra.mxu0 %v364
        %859 = vmatprep.subr.mxu0 0.0
        %860 = vmatpush1.msra.mxu0 %v367
        %861 = vmatprep.subr.mxu0 0.0
        %862 = vmatpush1.msra.mxu0 %v370
        %863 = vmatprep.subr.mxu0 0.0
        %864 = vmatpush1.msra.mxu0 %v373
        %865 = vmatprep.subr.mxu0 0.0
        %866 = vmatpush1.msra.mxu0 %v376
        %867 = vmatprep.subr.mxu0 0.0
        %868 = vmatpush1.msra.mxu0 0.0
        %869 = vmatprep.subr.mxu0 0.0
        %870 = vmatpush1.msra.mxu0 0.0
        %871 = vmatprep.subr.mxu0 0.0
        %872 = vmatpush1.msra.mxu0 0.0
        %873 = vmatprep.subr.mxu0 0.0
        %874 = vmatpush1.msra.mxu0 0.0
        %875 = vmatprep.subr.mxu0 0.0
        %876 = vmatpush1.msra.mxu0 0.0
        %877 = vmatprep.subr.mxu0 0.0
        %878 = vmatpush1.msra.mxu0 0.0
        %879 = vmatprep.subr.mxu0 0.0
        %880 = vmatpush1.msra.mxu0 0.0
        %881 = vmatprep.subr.mxu0 0.0
        %882 = vmatpush1.msra.mxu0 0.0
        %883 = vmatprep.subr.mxu0 0.0
        %884 = vmatpush1.msra.mxu0 0.0
        %885 = vmatprep.subr.mxu0 0.0
        %886 = vmatpush1.msra.mxu0 0.0
        %887 = vmatprep.subr.mxu0 0.0
        %888 = vmatpush1.msra.mxu0 0.0
        %889 = vmatprep.subr.mxu0 0.0
        %890 = vmatpush1.msra.mxu0 0.0
        %891 = vmatprep.subr.mxu0 0.0
        %892 = vmatpush1.msra.mxu0 0.0
        %893 = vmatprep.subr.mxu0 0.0
        %894 = vmatpush1.msra.mxu0 0.0
        %895 = vmatprep.subr.mxu0 0.0
        %896 = vmatpush1.msra.mxu0 0.0
        %897 = vmatprep.subr.mxu0 0.0
        %898 = vmatpush1.msra.mxu0 0.0
        %899 = vmatprep.mubr.f32.mxu0 0.0
        %900 = vmatmul.mubr.f32.gmra.mrb[0].mxu0 %v615
        %v901 = vpop.f32.mrb[0].mxu0
        %v902 = vadd.f32 0.0, %v901
        %v903 = vpop.f32.mrb[0].mxu0
        %904 = vdwg.mxu0
        %v905 = vadd.f32 %v761, %v831
        %v906 = vxor.u32 %v905, 2147483648
        %v907 = vmul.f32 %v906, 1.442695
        %v908 = vpow.pop %v907
        %v909 = vadd.f32 %v908, 1.0
        %v910 = vrcp.pop %v909
        %v911 = vmul.f32 1.0, %v910
        %v912 = vadd.f32 %v762, %v833
        %v913 = vxor.u32 %v912, 2147483648
        %v914 = vmul.f32 %v913, 1.442695
        %v915 = vpow.pop %v914
        %v916 = vadd.f32 %v915, 1.0
        %v917 = vrcp.pop %v916
        %v918 = vmul.f32 1.0, %v917
        %v919 = vadd.f32 %v902, %v382
        %v920 = vmul.f32 %v911, %v919
        %v921 = vadd.f32 %v763, %v920
        %v922 = vtanh.pop %v921
        %v923 = vsub.f32 1.0, %v918
        %v924 = vmul.f32 %v923, %v922
        %v925 = vmul.f32 %v918, %v615
        %v926 = vadd.f32 %v924, %v925
        %927 = vmatprep.subr.mxu0 %v385
        %928 = vmatpush1.msra.mxu0 %v384
        %929 = vmatprep.subr.mxu0 %v388
        %930 = vmatpush1.msra.mxu0 %v387
        %931 = vmatprep.subr.mxu0 %v391
        %932 = vmatpush1.msra.mxu0 %v390
        %933 = vmatprep.subr.mxu0 %v394
        %934 = vmatpush1.msra.mxu0 %v393
        %935 = vmatprep.subr.mxu0 %v397
        %936 = vmatpush1.msra.mxu0 %v396
        %937 = vmatprep.subr.mxu0 %v400
        %938 = vmatpush1.msra.mxu0 %v399
        %939 = vmatprep.subr.mxu0 %v403
        %940 = vmatpush1.msra.mxu0 %v402
        %941 = vmatprep.subr.mxu0 %v406
        %942 = vmatpush1.msra.mxu0 %v405
        %943 = vmatprep.subr.mxu0 %v409
        %944 = vmatpush1.msra.mxu0 %v408
        %945 = vmatprep.subr.mxu0 %v412
        %946 = vmatpush1.msra.mxu0 %v411
        %947 = vmatprep.subr.mxu0 %v415
        %948 = vmatpush1.msra.mxu0 %v414
        %949 = vmatprep.subr.mxu0 %v418
        %950 = vmatpush1.msra.mxu0 %v417
        %951 = vmatprep.subr.mxu0 %v421
        %952 = vmatpush1.msra.mxu0 %v420
        %953 = vmatprep.subr.mxu0 %v424
        %954 = vmatpush1.msra.mxu0 %v423
        %955 = vmatprep.subr.mxu0 %v427
        %956 = vmatpush1.msra.mxu0 %v426
        %957 = vmatprep.subr.mxu0 %v430
        %958 = vmatpush1.msra.mxu0 %v429
        %959 = vmatprep.subr.mxu0 0.0
        %960 = vmatpush1.msra.mxu0 0.0
        %961 = vmatprep.subr.mxu0 0.0
        %962 = vmatpush1.msra.mxu0 0.0
        %963 = vmatprep.subr.mxu0 0.0
        %964 = vmatpush1.msra.mxu0 0.0
        %965 = vmatprep.subr.mxu0 0.0
        %966 = vmatpush1.msra.mxu0 0.0
        %967 = vmatprep.subr.mxu0 0.0
        %968 = vmatpush1.msra.mxu0 0.0
        %969 = vmatprep.subr.mxu0 0.0
        %970 = vmatpush1.msra.mxu0 0.0
        %971 = vmatprep.subr.mxu0 0.0
        %972 = vmatpush1.msra.mxu0 0.0
        %973 = vmatprep.subr.mxu0 0.0
        %974 = vmatpush1.msra.mxu0 0.0
        %975 = vmatprep.subr.mxu0 0.0
        %976 = vmatpush1.msra.mxu0 0.0
        %977 = vmatprep.subr.mxu0 0.0
        %978 = vmatpush1.msra.mxu0 0.0
        %979 = vmatprep.subr.mxu0 0.0
        %980 = vmatpush1.msra.mxu0 0.0
        %981 = vmatprep.subr.mxu0 0.0
        %982 = vmatpush1.msra.mxu0 0.0
        %983 = vmatprep.subr.mxu0 0.0
        %984 = vmatpush1.msra.mxu0 0.0
        %985 = vmatprep.subr.mxu0 0.0
        %986 = vmatpush1.msra.mxu0 0.0
        %987 = vmatprep.subr.mxu0 0.0
        %988 = vmatpush1.msra.mxu0 0.0
        %989 = vmatprep.subr.mxu0 0.0
        %990 = vmatpush1.msra.mxu0 0.0
        %991 = vmatprep.mubr.f32.mxu0 0.0
        %992 = vmatmul.mubr.f32.gmra.mrb[0].mxu0 %v926
        %v993 = vpop.f32.mrb[0].mxu0
        %v994 = vadd.f32 %v437, %v993
        %v995 = vpop.f32.mrb[0].mxu0
        %v996 = vadd.f32 %v441, %v995
        %997 = vdwg.mxu0
        %998 = vmatprep.subr.mxu0 0.0
        %999 = vmatpush1.msra.mxu0 %v386
        %1000 = vmatprep.subr.mxu0 0.0
        %1001 = vmatpush1.msra.mxu0 %v389
        %1002 = vmatprep.subr.mxu0 0.0
        %1003 = vmatpush1.msra.mxu0 %v392
        %1004 = vmatprep.subr.mxu0 0.0
        %1005 = vmatpush1.msra.mxu0 %v395
        %1006 = vmatprep.subr.mxu0 0.0
        %1007 = vmatpush1.msra.mxu0 %v398
        %1008 = vmatprep.subr.mxu0 0.0
        %1009 = vmatpush1.msra.mxu0 %v401
        %1010 = vmatprep.subr.mxu0 0.0
        %1011 = vmatpush1.msra.mxu0 %v404
        %1012 = vmatprep.subr.mxu0 0.0
        %1013 = vmatpush1.msra.mxu0 %v407
        %1014 = vmatprep.subr.mxu0 0.0
        %1015 = vmatpush1.msra.mxu0 %v410
        %1016 = vmatprep.subr.mxu0 0.0
        %1017 = vmatpush1.msra.mxu0 %v413
        %1018 = vmatprep.subr.mxu0 0.0
        %1019 = vmatpush1.msra.mxu0 %v416
        %1020 = vmatprep.subr.mxu0 0.0
        %1021 = vmatpush1.msra.mxu0 %v419
        %1022 = vmatprep.subr.mxu0 0.0
        %1023 = vmatpush1.msra.mxu0 %v422
        %1024 = vmatprep.subr.mxu0 0.0
        %1025 = vmatpush1.msra.mxu0 %v425
        %1026 = vmatprep.subr.mxu0 0.0
        %1027 = vmatpush1.msra.mxu0 %v428
        %1028 = vmatprep.subr.mxu0 0.0
        %1029 = vmatpush1.msra.mxu0 %v431
        %1030 = vmatprep.subr.mxu0 0.0
        %1031 = vmatpush1.msra.mxu0 0.0
        %1032 = vmatprep.subr.mxu0 0.0
        %1033 = vmatpush1.msra.mxu0 0.0
        %1034 = vmatprep.subr.mxu0 0.0
        %1035 = vmatpush1.msra.mxu0 0.0
        %1036 = vmatprep.subr.mxu0 0.0
        %1037 = vmatpush1.msra.mxu0 0.0
        %1038 = vmatprep.subr.mxu0 0.0
        %1039 = vmatpush1.msra.mxu0 0.0
        %1040 = vmatprep.subr.mxu0 0.0
        %1041 = vmatpush1.msra.mxu0 0.0
        %1042 = vmatprep.subr.mxu0 0.0
        %1043 = vmatpush1.msra.mxu0 0.0
        %1044 = vmatprep.subr.mxu0 0.0
        %1045 = vmatpush1.msra.mxu0 0.0
        %1046 = vmatprep.subr.mxu0 0.0
        %1047 = vmatpush1.msra.mxu0 0.0
        %1048 = vmatprep.subr.mxu0 0.0
        %1049 = vmatpush1.msra.mxu0 0.0
        %1050 = vmatprep.subr.mxu0 0.0
        %1051 = vmatpush1.msra.mxu0 0.0
        %1052 = vmatprep.subr.mxu0 0.0
        %1053 = vmatpush1.msra.mxu0 0.0
        %1054 = vmatprep.subr.mxu0 0.0
        %1055 = vmatpush1.msra.mxu0 0.0
        %1056 = vmatprep.subr.mxu0 0.0
        %1057 = vmatpush1.msra.mxu0 0.0
        %1058 = vmatprep.subr.mxu0 0.0
        %1059 = vmatpush1.msra.mxu0 0.0
        %1060 = vmatprep.subr.mxu0 0.0
        %1061 = vmatpush1.msra.mxu0 0.0
        %1062 = vmatprep.mubr.f32.mxu0 0.0
        %1063 = vmatmul.mubr.f32.gmra.mrb[0].mxu0 %v926
        %v1064 = vpop.f32.mrb[0].mxu0
        %v1065 = vadd.f32 %v445, %v1064
        %v1066 = vpop.f32.mrb[0].mxu0
        %1067 = vdwg.mxu0
        %s1068 = scalar_lea.vmem %s319, 24 [#allocation9]
        %1069 = vst [vmem:[%s1068] sm:$0xff] %v994
        %1070 = vst [vmem:[%s1068 + $0x8] sm:$0xff] %v996
        %1071 = vst [vmem:[%s1068 + $0x10] sm:$0xff] %v1065
        %s1072 = scalar_lea.vmem %s285, 48 [#allocation3]
        %v1073 = vld [vmem:[%s1072] sm:$0xff]
        %v1074 = vld [vmem:[%s1072 + $0x8] sm:$0xff]
        %v1075 = vld [vmem:[%s1072 + $0x10] sm:$0xff]
        %1076 = vmatprep.subr.mxu0 %v330
        %1077 = vmatpush1.msra.mxu0 %v329
        %1078 = vmatprep.subr.mxu0 %v333
        %1079 = vmatpush1.msra.mxu0 %v332
        %1080 = vmatprep.subr.mxu0 %v336
        %1081 = vmatpush1.msra.mxu0 %v335
        %1082 = vmatprep.subr.mxu0 %v339
        %1083 = vmatpush1.msra.mxu0 %v338
        %1084 = vmatprep.subr.mxu0 %v342
        %1085 = vmatpush1.msra.mxu0 %v341
        %1086 = vmatprep.subr.mxu0 %v345
        %1087 = vmatpush1.msra.mxu0 %v344
        %1088 = vmatprep.subr.mxu0 %v348
        %1089 = vmatpush1.msra.mxu0 %v347
        %1090 = vmatprep.subr.mxu0 %v351
        %1091 = vmatpush1.msra.mxu0 %v350
        %1092 = vmatprep.subr.mxu0 %v354
        %1093 = vmatpush1.msra.mxu0 %v353
        %1094 = vmatprep.subr.mxu0 %v357
        %1095 = vmatpush1.msra.mxu0 %v356
        %1096 = vmatprep.subr.mxu0 %v360
        %1097 = vmatpush1.msra.mxu0 %v359
        %1098 = vmatprep.subr.mxu0 %v363
        %1099 = vmatpush1.msra.mxu0 %v362
        %1100 = vmatprep.subr.mxu0 %v366
        %1101 = vmatpush1.msra.mxu0 %v365
        %1102 = vmatprep.subr.mxu0 %v369
        %1103 = vmatpush1.msra.mxu0 %v368
        %1104 = vmatprep.subr.mxu0 %v372
        %1105 = vmatpush1.msra.mxu0 %v371
        %1106 = vmatprep.subr.mxu0 %v375
        %1107 = vmatpush1.msra.mxu0 %v374
        %1108 = vmatprep.subr.mxu0 0.0
        %1109 = vmatpush1.msra.mxu0 0.0
        %1110 = vmatprep.subr.mxu0 0.0
        %1111 = vmatpush1.msra.mxu0 0.0
        %1112 = vmatprep.subr.mxu0 0.0
        %1113 = vmatpush1.msra.mxu0 0.0
        %1114 = vmatprep.subr.mxu0 0.0
        %1115 = vmatpush1.msra.mxu0 0.0
        %1116 = vmatprep.subr.mxu0 0.0
        %1117 = vmatpush1.msra.mxu0 0.0
        %1118 = vmatprep.subr.mxu0 0.0
        %1119 = vmatpush1.msra.mxu0 0.0
        %1120 = vmatprep.subr.mxu0 0.0
        %1121 = vmatpush1.msra.mxu0 0.0
        %1122 = vmatprep.subr.mxu0 0.0
        %1123 = vmatpush1.msra.mxu0 0.0
        %1124 = vmatprep.subr.mxu0 0.0
        %1125 = vmatpush1.msra.mxu0 0.0
        %1126 = vmatprep.subr.mxu0 0.0
        %1127 = vmatpush1.msra.mxu0 0.0
        %1128 = vmatprep.subr.mxu0 0.0
        %1129 = vmatpush1.msra.mxu0 0.0
        %1130 = vmatprep.subr.mxu0 0.0
        %1131 = vmatpush1.msra.mxu0 0.0
        %1132 = vmatprep.subr.mxu0 0.0
        %1133 = vmatpush1.msra.mxu0 0.0
        %1134 = vmatprep.subr.mxu0 0.0
        %1135 = vmatpush1.msra.mxu0 0.0
        %1136 = vmatprep.subr.mxu0 0.0
        %1137 = vmatpush1.msra.mxu0 0.0
        %1138 = vmatprep.subr.mxu0 0.0
        %1139 = vmatpush1.msra.mxu0 0.0
        %1140 = vmatprep.mubr.f32.mxu0 0.0
        %1141 = vmatmul.mubr.f32.gmra.mrb[0].mxu0 %v926
        %v1142 = vpop.f32.mrb[0].mxu0
        %v1143 = vadd.f32 0.0, %v1142
        %v1144 = vpop.f32.mrb[0].mxu0
        %v1145 = vadd.f32 0.0, %v1144
        %1146 = vdwg.mxu0
        %1147 = vmatprep.subr.mxu0 0.0
        %1148 = vmatpush1.msra.mxu0 %v331
        %1149 = vmatprep.subr.mxu0 0.0
        %1150 = vmatpush1.msra.mxu0 %v334
        %1151 = vmatprep.subr.mxu0 0.0
        %1152 = vmatpush1.msra.mxu0 %v337
        %1153 = vmatprep.subr.mxu0 0.0
        %1154 = vmatpush1.msra.mxu0 %v340
        %1155 = vmatprep.subr.mxu0 0.0
        %1156 = vmatpush1.msra.mxu0 %v343
        %1157 = vmatprep.subr.mxu0 0.0
        %1158 = vmatpush1.msra.mxu0 %v346
        %1159 = vmatprep.subr.mxu0 0.0
        %1160 = vmatpush1.msra.mxu0 %v349
        %1161 = vmatprep.subr.mxu0 0.0
        %1162 = vmatpush1.msra.mxu0 %v352
        %1163 = vmatprep.subr.mxu0 0.0
        %1164 = vmatpush1.msra.mxu0 %v355
        %1165 = vmatprep.subr.mxu0 0.0
        %1166 = vmatpush1.msra.mxu0 %v358
        %1167 = vmatprep.subr.mxu0 0.0
        %1168 = vmatpush1.msra.mxu0 %v361
        %1169 = vmatprep.subr.mxu0 0.0
        %1170 = vmatpush1.msra.mxu0 %v364
        %1171 = vmatprep.subr.mxu0 0.0
        %1172 = vmatpush1.msra.mxu0 %v367
        %1173 = vmatprep.subr.mxu0 0.0
        %1174 = vmatpush1.msra.mxu0 %v370
        %1175 = vmatprep.subr.mxu0 0.0
        %1176 = vmatpush1.msra.mxu0 %v373
        %1177 = vmatprep.subr.mxu0 0.0
        %1178 = vmatpush1.msra.mxu0 %v376
        %1179 = vmatprep.subr.mxu0 0.0
        %1180 = vmatpush1.msra.mxu0 0.0
        %1181 = vmatprep.subr.mxu0 0.0
        %1182 = vmatpush1.msra.mxu0 0.0
        %1183 = vmatprep.subr.mxu0 0.0
        %1184 = vmatpush1.msra.mxu0 0.0
        %1185 = vmatprep.subr.mxu0 0.0
        %1186 = vmatpush1.msra.mxu0 0.0
        %1187 = vmatprep.subr.mxu0 0.0
        %1188 = vmatpush1.msra.mxu0 0.0
        %1189 = vmatprep.subr.mxu0 0.0
        %1190 = vmatpush1.msra.mxu0 0.0
        %1191 = vmatprep.subr.mxu0 0.0
        %1192 = vmatpush1.msra.mxu0 0.0
        %1193 = vmatprep.subr.mxu0 0.0
        %1194 = vmatpush1.msra.mxu0 0.0
        %1195 = vmatprep.subr.mxu0 0.0
        %1196 = vmatpush1.msra.mxu0 0.0
        %1197 = vmatprep.subr.mxu0 0.0
        %1198 = vmatpush1.msra.mxu0 0.0
        %1199 = vmatprep.subr.mxu0 0.0
        %1200 = vmatpush1.msra.mxu0 0.0
        %1201 = vmatprep.subr.mxu0 0.0
        %1202 = vmatpush1.msra.mxu0 0.0
        %1203 = vmatprep.subr.mxu0 0.0
        %1204 = vmatpush1.msra.mxu0 0.0
        %1205 = vmatprep.subr.mxu0 0.0
        %1206 = vmatpush1.msra.mxu0 0.0
        %1207 = vmatprep.subr.mxu0 0.0
        %1208 = vmatpush1.msra.mxu0 0.0
        %1209 = vmatprep.subr.mxu0 0.0
        %1210 = vmatpush1.msra.mxu0 0.0
        %1211 = vmatprep.mubr.f32.mxu0 0.0
        %1212 = vmatmul.mubr.f32.gmra.mrb[0].mxu0 %v926
        %v1213 = vpop.f32.mrb[0].mxu0
        %v1214 = vadd.f32 0.0, %v1213
        %v1215 = vpop.f32.mrb[0].mxu0
        %1216 = vdwg.mxu0
        %v1217 = vadd.f32 %v1073, %v1143
        %v1218 = vxor.u32 %v1217, 2147483648
        %v1219 = vmul.f32 %v1218, 1.442695
        %v1220 = vpow.pop %v1219
        %v1221 = vadd.f32 %v1220, 1.0
        %v1222 = vrcp.pop %v1221
        %v1223 = vmul.f32 1.0, %v1222
        %v1224 = vadd.f32 %v1074, %v1145
        %v1225 = vxor.u32 %v1224, 2147483648
        %v1226 = vmul.f32 %v1225, 1.442695
        %v1227 = vpow.pop %v1226
        %v1228 = vadd.f32 %v1227, 1.0
        %v1229 = vrcp.pop %v1228
        %v1230 = vmul.f32 1.0, %v1229
        %v1231 = vadd.f32 %v1214, %v382
        %v1232 = vmul.f32 %v1223, %v1231
        %v1233 = vadd.f32 %v1075, %v1232
        %v1234 = vtanh.pop %v1233
        %v1235 = vsub.f32 1.0, %v1230
        %v1236 = vmul.f32 %v1235, %v1234
        %v1237 = vmul.f32 %v1230, %v926
        %v1238 = vadd.f32 %v1236, %v1237
        %1239 = vmatprep.subr.mxu0 %v385
        %1240 = vmatpush1.msra.mxu0 %v384
        %1241 = vmatprep.subr.mxu0 %v388
        %1242 = vmatpush1.msra.mxu0 %v387
        %1243 = vmatprep.subr.mxu0 %v391
        %1244 = vmatpush1.msra.mxu0 %v390
        %1245 = vmatprep.subr.mxu0 %v394
        %1246 = vmatpush1.msra.mxu0 %v393
        %1247 = vmatprep.subr.mxu0 %v397
        %1248 = vmatpush1.msra.mxu0 %v396
        %1249 = vmatprep.subr.mxu0 %v400
        %1250 = vmatpush1.msra.mxu0 %v399
        %1251 = vmatprep.subr.mxu0 %v403
        %1252 = vmatpush1.msra.mxu0 %v402
        %1253 = vmatprep.subr.mxu0 %v406
        %1254 = vmatpush1.msra.mxu0 %v405
        %1255 = vmatprep.subr.mxu0 %v409
        %1256 = vmatpush1.msra.mxu0 %v408
        %1257 = vmatprep.subr.mxu0 %v412
        %1258 = vmatpush1.msra.mxu0 %v411
        %1259 = vmatprep.subr.mxu0 %v415
        %1260 = vmatpush1.msra.mxu0 %v414
        %1261 = vmatprep.subr.mxu0 %v418
        %1262 = vmatpush1.msra.mxu0 %v417
        %1263 = vmatprep.subr.mxu0 %v421
        %1264 = vmatpush1.msra.mxu0 %v420
        %1265 = vmatprep.subr.mxu0 %v424
        %1266 = vmatpush1.msra.mxu0 %v423
        %1267 = vmatprep.subr.mxu0 %v427
        %1268 = vmatpush1.msra.mxu0 %v426
        %1269 = vmatprep.subr.mxu0 %v430
        %1270 = vmatpush1.msra.mxu0 %v429
        %1271 = vmatprep.subr.mxu0 0.0
        %1272 = vmatpush1.msra.mxu0 0.0
        %1273 = vmatprep.subr.mxu0 0.0
        %1274 = vmatpush1.msra.mxu0 0.0
        %1275 = vmatprep.subr.mxu0 0.0
        %1276 = vmatpush1.msra.mxu0 0.0
        %1277 = vmatprep.subr.mxu0 0.0
        %1278 = vmatpush1.msra.mxu0 0.0
        %1279 = vmatprep.subr.mxu0 0.0
        %1280 = vmatpush1.msra.mxu0 0.0
        %1281 = vmatprep.subr.mxu0 0.0
        %1282 = vmatpush1.msra.mxu0 0.0
        %1283 = vmatprep.subr.mxu0 0.0
        %1284 = vmatpush1.msra.mxu0 0.0
        %1285 = vmatprep.subr.mxu0 0.0
        %1286 = vmatpush1.msra.mxu0 0.0
        %1287 = vmatprep.subr.mxu0 0.0
        %1288 = vmatpush1.msra.mxu0 0.0
        %1289 = vmatprep.subr.mxu0 0.0
        %1290 = vmatpush1.msra.mxu0 0.0
        %1291 = vmatprep.subr.mxu0 0.0
        %1292 = vmatpush1.msra.mxu0 0.0
        %1293 = vmatprep.subr.mxu0 0.0
        %1294 = vmatpush1.msra.mxu0 0.0
        %1295 = vmatprep.subr.mxu0 0.0
        %1296 = vmatpush1.msra.mxu0 0.0
        %1297 = vmatprep.subr.mxu0 0.0
        %1298 = vmatpush1.msra.mxu0 0.0
        %1299 = vmatprep.subr.mxu0 0.0
        %1300 = vmatpush1.msra.mxu0 0.0
        %1301 = vmatprep.subr.mxu0 0.0
        %1302 = vmatpush1.msra.mxu0 0.0
        %1303 = vmatprep.mubr.f32.mxu0 0.0
        %1304 = vmatmul.mubr.f32.gmra.mrb[0].mxu0 %v1238
        %v1305 = vpop.f32.mrb[0].mxu0
        %v1306 = vadd.f32 %v437, %v1305
        %v1307 = vpop.f32.mrb[0].mxu0
        %v1308 = vadd.f32 %v441, %v1307
        %1309 = vdwg.mxu0
        %1310 = vmatprep.subr.mxu0 0.0
        %1311 = vmatpush1.msra.mxu0 %v386
        %1312 = vmatprep.subr.mxu0 0.0
        %1313 = vmatpush1.msra.mxu0 %v389
        %1314 = vmatprep.subr.mxu0 0.0
        %1315 = vmatpush1.msra.mxu0 %v392
        %1316 = vmatprep.subr.mxu0 0.0
        %1317 = vmatpush1.msra.mxu0 %v395
        %1318 = vmatprep.subr.mxu0 0.0
        %1319 = vmatpush1.msra.mxu0 %v398
        %1320 = vmatprep.subr.mxu0 0.0
        %1321 = vmatpush1.msra.mxu0 %v401
        %1322 = vmatprep.subr.mxu0 0.0
        %1323 = vmatpush1.msra.mxu0 %v404
        %1324 = vmatprep.subr.mxu0 0.0
        %1325 = vmatpush1.msra.mxu0 %v407
        %1326 = vmatprep.subr.mxu0 0.0
        %1327 = vmatpush1.msra.mxu0 %v410
        %1328 = vmatprep.subr.mxu0 0.0
        %1329 = vmatpush1.msra.mxu0 %v413
        %1330 = vmatprep.subr.mxu0 0.0
        %1331 = vmatpush1.msra.mxu0 %v416
        %1332 = vmatprep.subr.mxu0 0.0
        %1333 = vmatpush1.msra.mxu0 %v419
        %1334 = vmatprep.subr.mxu0 0.0
        %1335 = vmatpush1.msra.mxu0 %v422
        %1336 = vmatprep.subr.mxu0 0.0
        %1337 = vmatpush1.msra.mxu0 %v425
        %1338 = vmatprep.subr.mxu0 0.0
        %1339 = vmatpush1.msra.mxu0 %v428
        %1340 = vmatprep.subr.mxu0 0.0
        %1341 = vmatpush1.msra.mxu0 %v431
        %1342 = vmatprep.subr.mxu0 0.0
        %1343 = vmatpush1.msra.mxu0 0.0
        %1344 = vmatprep.subr.mxu0 0.0
        %1345 = vmatpush1.msra.mxu0 0.0
        %1346 = vmatprep.subr.mxu0 0.0
        %1347 = vmatpush1.msra.mxu0 0.0
        %1348 = vmatprep.subr.mxu0 0.0
        %1349 = vmatpush1.msra.mxu0 0.0
        %1350 = vmatprep.subr.mxu0 0.0
        %1351 = vmatpush1.msra.mxu0 0.0
        %1352 = vmatprep.subr.mxu0 0.0
        %1353 = vmatpush1.msra.mxu0 0.0
        %1354 = vmatprep.subr.mxu0 0.0
        %1355 = vmatpush1.msra.mxu0 0.0
        %1356 = vmatprep.subr.mxu0 0.0
        %1357 = vmatpush1.msra.mxu0 0.0
        %1358 = vmatprep.subr.mxu0 0.0
        %1359 = vmatpush1.msra.mxu0 0.0
        %1360 = vmatprep.subr.mxu0 0.0
        %1361 = vmatpush1.msra.mxu0 0.0
        %1362 = vmatprep.subr.mxu0 0.0
        %1363 = vmatpush1.msra.mxu0 0.0
        %1364 = vmatprep.subr.mxu0 0.0
        %1365 = vmatpush1.msra.mxu0 0.0
        %1366 = vmatprep.subr.mxu0 0.0
        %1367 = vmatpush1.msra.mxu0 0.0
        %1368 = vmatprep.subr.mxu0 0.0
        %1369 = vmatpush1.msra.mxu0 0.0
        %1370 = vmatprep.subr.mxu0 0.0
        %1371 = vmatpush1.msra.mxu0 0.0
        %1372 = vmatprep.subr.mxu0 0.0
        %1373 = vmatpush1.msra.mxu0 0.0
        %1374 = vmatprep.mubr.f32.mxu0 0.0
        %1375 = vmatmul.mubr.f32.gmra.mrb[0].mxu0 %v1238
        %v1376 = vpop.f32.mrb[0].mxu0
        %v1377 = vadd.f32 %v445, %v1376
        %v1378 = vpop.f32.mrb[0].mxu0
        %1379 = vdwg.mxu0
        %s1380 = scalar_lea.vmem %s319, 48 [#allocation9]
        %1381 = vst [vmem:[%s1380] sm:$0xff] %v1306
        %1382 = vst [vmem:[%s1380 + $0x8] sm:$0xff] %v1308
        %1383 = vst [vmem:[%s1380 + $0x10] sm:$0xff] %v1377
        %s1384 = scalar_lea.vmem %s285, 72 [#allocation3]
        %v1385 = vld [vmem:[%s1384] sm:$0xff]
        %v1386 = vld [vmem:[%s1384 + $0x8] sm:$0xff]
        %v1387 = vld [vmem:[%s1384 + $0x10] sm:$0xff]
        %1388 = vmatprep.subr.mxu0 %v330
        %1389 = vmatpush1.msra.mxu0 %v329
        %1390 = vmatprep.subr.mxu0 %v333
        %1391 = vmatpush1.msra.mxu0 %v332
        %1392 = vmatprep.subr.mxu0 %v336
        %1393 = vmatpush1.msra.mxu0 %v335
        %1394 = vmatprep.subr.mxu0 %v339
        %1395 = vmatpush1.msra.mxu0 %v338
        %1396 = vmatprep.subr.mxu0 %v342
        %1397 = vmatpush1.msra.mxu0 %v341
        %1398 = vmatprep.subr.mxu0 %v345
        %1399 = vmatpush1.msra.mxu0 %v344
        %1400 = vmatprep.subr.mxu0 %v348
        %1401 = vmatpush1.msra.mxu0 %v347
        %1402 = vmatprep.subr.mxu0 %v351
        %1403 = vmatpush1.msra.mxu0 %v350
        %1404 = vmatprep.subr.mxu0 %v354
        %1405 = vmatpush1.msra.mxu0 %v353
        %1406 = vmatprep.subr.mxu0 %v357
        %1407 = vmatpush1.msra.mxu0 %v356
        %1408 = vmatprep.subr.mxu0 %v360
        %1409 = vmatpush1.msra.mxu0 %v359
        %1410 = vmatprep.subr.mxu0 %v363
        %1411 = vmatpush1.msra.mxu0 %v362
        %1412 = vmatprep.subr.mxu0 %v366
        %1413 = vmatpush1.msra.mxu0 %v365
        %1414 = vmatprep.subr.mxu0 %v369
        %1415 = vmatpush1.msra.mxu0 %v368
        %1416 = vmatprep.subr.mxu0 %v372
        %1417 = vmatpush1.msra.mxu0 %v371
        %1418 = vmatprep.subr.mxu0 %v375
        %1419 = vmatpush1.msra.mxu0 %v374
        %1420 = vmatprep.subr.mxu0 0.0
        %1421 = vmatpush1.msra.mxu0 0.0
        %1422 = vmatprep.subr.mxu0 0.0
        %1423 = vmatpush1.msra.mxu0 0.0
        %1424 = vmatprep.subr.mxu0 0.0
        %1425 = vmatpush1.msra.mxu0 0.0
        %1426 = vmatprep.subr.mxu0 0.0
        %1427 = vmatpush1.msra.mxu0 0.0
        %1428 = vmatprep.subr.mxu0 0.0
        %1429 = vmatpush1.msra.mxu0 0.0
        %1430 = vmatprep.subr.mxu0 0.0
        %1431 = vmatpush1.msra.mxu0 0.0
        %1432 = vmatprep.subr.mxu0 0.0
        %1433 = vmatpush1.msra.mxu0 0.0
        %1434 = vmatprep.subr.mxu0 0.0
        %1435 = vmatpush1.msra.mxu0 0.0
        %1436 = vmatprep.subr.mxu0 0.0
        %1437 = vmatpush1.msra.mxu0 0.0
        %1438 = vmatprep.subr.mxu0 0.0
        %1439 = vmatpush1.msra.mxu0 0.0
        %1440 = vmatprep.subr.mxu0 0.0
        %1441 = vmatpush1.msra.mxu0 0.0
        %1442 = vmatprep.subr.mxu0 0.0
        %1443 = vmatpush1.msra.mxu0 0.0
        %1444 = vmatprep.subr.mxu0 0.0
        %1445 = vmatpush1.msra.mxu0 0.0
        %1446 = vmatprep.subr.mxu0 0.0
        %1447 = vmatpush1.msra.mxu0 0.0
        %1448 = vmatprep.subr.mxu0 0.0
        %1449 = vmatpush1.msra.mxu0 0.0
        %1450 = vmatprep.subr.mxu0 0.0
        %1451 = vmatpush1.msra.mxu0 0.0
        %1452 = vmatprep.mubr.f32.mxu0 0.0
        %1453 = vmatmul.mubr.f32.gmra.mrb[0].mxu0 %v1238
        %v1454 = vpop.f32.mrb[0].mxu0
        %v1455 = vadd.f32 0.0, %v1454
        %v1456 = vpop.f32.mrb[0].mxu0
        %v1457 = vadd.f32 0.0, %v1456
        %1458 = vdwg.mxu0
        %1459 = vmatprep.subr.mxu0 0.0
        %1460 = vmatpush1.msra.mxu0 %v331
        %1461 = vmatprep.subr.mxu0 0.0
        %1462 = vmatpush1.msra.mxu0 %v334
        %1463 = vmatprep.subr.mxu0 0.0
        %1464 = vmatpush1.msra.mxu0 %v337
        %1465 = vmatprep.subr.mxu0 0.0
        %1466 = vmatpush1.msra.mxu0 %v340
        %1467 = vmatprep.subr.mxu0 0.0
        %1468 = vmatpush1.msra.mxu0 %v343
        %1469 = vmatprep.subr.mxu0 0.0
        %1470 = vmatpush1.msra.mxu0 %v346
        %1471 = vmatprep.subr.mxu0 0.0
        %1472 = vmatpush1.msra.mxu0 %v349
        %1473 = vmatprep.subr.mxu0 0.0
        %1474 = vmatpush1.msra.mxu0 %v352
        %1475 = vmatprep.subr.mxu0 0.0
        %1476 = vmatpush1.msra.mxu0 %v355
        %1477 = vmatprep.subr.mxu0 0.0
        %1478 = vmatpush1.msra.mxu0 %v358
        %1479 = vmatprep.subr.mxu0 0.0
        %1480 = vmatpush1.msra.mxu0 %v361
        %1481 = vmatprep.subr.mxu0 0.0
        %1482 = vmatpush1.msra.mxu0 %v364
        %1483 = vmatprep.subr.mxu0 0.0
        %1484 = vmatpush1.msra.mxu0 %v367
        %1485 = vmatprep.subr.mxu0 0.0
        %1486 = vmatpush1.msra.mxu0 %v370
        %1487 = vmatprep.subr.mxu0 0.0
        %1488 = vmatpush1.msra.mxu0 %v373
        %1489 = vmatprep.subr.mxu0 0.0
        %1490 = vmatpush1.msra.mxu0 %v376
        %1491 = vmatprep.subr.mxu0 0.0
        %1492 = vmatpush1.msra.mxu0 0.0
        %1493 = vmatprep.subr.mxu0 0.0
        %1494 = vmatpush1.msra.mxu0 0.0
        %1495 = vmatprep.subr.mxu0 0.0
        %1496 = vmatpush1.msra.mxu0 0.0
        %1497 = vmatprep.subr.mxu0 0.0
        %1498 = vmatpush1.msra.mxu0 0.0
        %1499 = vmatprep.subr.mxu0 0.0
        %1500 = vmatpush1.msra.mxu0 0.0
        %1501 = vmatprep.subr.mxu0 0.0
        %1502 = vmatpush1.msra.mxu0 0.0
        %1503 = vmatprep.subr.mxu0 0.0
        %1504 = vmatpush1.msra.mxu0 0.0
        %1505 = vmatprep.subr.mxu0 0.0
        %1506 = vmatpush1.msra.mxu0 0.0
        %1507 = vmatprep.subr.mxu0 0.0
        %1508 = vmatpush1.msra.mxu0 0.0
        %1509 = vmatprep.subr.mxu0 0.0
        %1510 = vmatpush1.msra.mxu0 0.0
        %1511 = vmatprep.subr.mxu0 0.0
        %1512 = vmatpush1.msra.mxu0 0.0
        %1513 = vmatprep.subr.mxu0 0.0
        %1514 = vmatpush1.msra.mxu0 0.0
        %1515 = vmatprep.subr.mxu0 0.0
        %1516 = vmatpush1.msra.mxu0 0.0
        %1517 = vmatprep.subr.mxu0 0.0
        %1518 = vmatpush1.msra.mxu0 0.0
        %1519 = vmatprep.subr.mxu0 0.0
        %1520 = vmatpush1.msra.mxu0 0.0
        %1521 = vmatprep.subr.mxu0 0.0
        %1522 = vmatpush1.msra.mxu0 0.0
        %1523 = vmatprep.mubr.f32.mxu0 0.0
        %1524 = vmatmul.mubr.f32.gmra.mrb[0].mxu0 %v1238
        %v1525 = vpop.f32.mrb[0].mxu0
        %v1526 = vadd.f32 0.0, %v1525
        %v1527 = vpop.f32.mrb[0].mxu0
        %1528 = vdwg.mxu0
        %v1529 = vadd.f32 %v1385, %v1455
        %v1530 = vxor.u32 %v1529, 2147483648
        %v1531 = vmul.f32 %v1530, 1.442695
        %v1532 = vpow.pop %v1531
        %v1533 = vadd.f32 %v1532, 1.0
        %v1534 = vrcp.pop %v1533
        %v1535 = vmul.f32 1.0, %v1534
        %v1536 = vadd.f32 %v1386, %v1457
        %v1537 = vxor.u32 %v1536, 2147483648
        %v1538 = vmul.f32 %v1537, 1.442695
        %v1539 = vpow.pop %v1538
        %v1540 = vadd.f32 %v1539, 1.0
        %v1541 = vrcp.pop %v1540
        %v1542 = vmul.f32 1.0, %v1541
        %v1543 = vadd.f32 %v1526, %v382
        %v1544 = vmul.f32 %v1535, %v1543
        %v1545 = vadd.f32 %v1387, %v1544
        %v1546 = vtanh.pop %v1545
        %v1547 = vsub.f32 1.0, %v1542
        %v1548 = vmul.f32 %v1547, %v1546
        %v1549 = vmul.f32 %v1542, %v1238
        %v1550 = vadd.f32 %v1548, %v1549
        %1551 = vmatprep.subr.mxu0 %v385
        %1552 = vmatpush1.msra.mxu0 %v384
        %1553 = vmatprep.subr.mxu0 %v388
        %1554 = vmatpush1.msra.mxu0 %v387
        %1555 = vmatprep.subr.mxu0 %v391
        %1556 = vmatpush1.msra.mxu0 %v390
        %1557 = vmatprep.subr.mxu0 %v394
        %1558 = vmatpush1.msra.mxu0 %v393
        %1559 = vmatprep.subr.mxu0 %v397
        %1560 = vmatpush1.msra.mxu0 %v396
        %1561 = vmatprep.subr.mxu0 %v400
        %1562 = vmatpush1.msra.mxu0 %v399
        %1563 = vmatprep.subr.mxu0 %v403
        %1564 = vmatpush1.msra.mxu0 %v402
        %1565 = vmatprep.subr.mxu0 %v406
        %1566 = vmatpush1.msra.mxu0 %v405
        %1567 = vmatprep.subr.mxu0 %v409
        %1568 = vmatpush1.msra.mxu0 %v408
        %1569 = vmatprep.subr.mxu0 %v412
        %1570 = vmatpush1.msra.mxu0 %v411
        %1571 = vmatprep.subr.mxu0 %v415
        %1572 = vmatpush1.msra.mxu0 %v414
        %1573 = vmatprep.subr.mxu0 %v418
        %1574 = vmatpush1.msra.mxu0 %v417
        %1575 = vmatprep.subr.mxu0 %v421
        %1576 = vmatpush1.msra.mxu0 %v420
        %1577 = vmatprep.subr.mxu0 %v424
        %1578 = vmatpush1.msra.mxu0 %v423
        %1579 = vmatprep.subr.mxu0 %v427
        %1580 = vmatpush1.msra.mxu0 %v426
        %1581 = vmatprep.subr.mxu0 %v430
        %1582 = vmatpush1.msra.mxu0 %v429
        %1583 = vmatprep.subr.mxu0 0.0
        %1584 = vmatpush1.msra.mxu0 0.0
        %1585 = vmatprep.subr.mxu0 0.0
        %1586 = vmatpush1.msra.mxu0 0.0
        %1587 = vmatprep.subr.mxu0 0.0
        %1588 = vmatpush1.msra.mxu0 0.0
        %1589 = vmatprep.subr.mxu0 0.0
        %1590 = vmatpush1.msra.mxu0 0.0
        %1591 = vmatprep.subr.mxu0 0.0
        %1592 = vmatpush1.msra.mxu0 0.0
        %1593 = vmatprep.subr.mxu0 0.0
        %1594 = vmatpush1.msra.mxu0 0.0
        %1595 = vmatprep.subr.mxu0 0.0
        %1596 = vmatpush1.msra.mxu0 0.0
        %1597 = vmatprep.subr.mxu0 0.0
        %1598 = vmatpush1.msra.mxu0 0.0
        %1599 = vmatprep.subr.mxu0 0.0
        %1600 = vmatpush1.msra.mxu0 0.0
        %1601 = vmatprep.subr.mxu0 0.0
        %1602 = vmatpush1.msra.mxu0 0.0
        %1603 = vmatprep.subr.mxu0 0.0
        %1604 = vmatpush1.msra.mxu0 0.0
        %1605 = vmatprep.subr.mxu0 0.0
        %1606 = vmatpush1.msra.mxu0 0.0
        %1607 = vmatprep.subr.mxu0 0.0
        %1608 = vmatpush1.msra.mxu0 0.0
        %1609 = vmatprep.subr.mxu0 0.0
        %1610 = vmatpush1.msra.mxu0 0.0
        %1611 = vmatprep.subr.mxu0 0.0
        %1612 = vmatpush1.msra.mxu0 0.0
        %1613 = vmatprep.subr.mxu0 0.0
        %1614 = vmatpush1.msra.mxu0 0.0
        %1615 = vmatprep.mubr.f32.mxu0 0.0
        %1616 = vmatmul.mubr.f32.gmra.mrb[0].mxu0 %v1550
        %v1617 = vpop.f32.mrb[0].mxu0
        %v1618 = vadd.f32 %v437, %v1617
        %v1619 = vpop.f32.mrb[0].mxu0
        %v1620 = vadd.f32 %v441, %v1619
        %1621 = vdwg.mxu0
        %1622 = vmatprep.subr.mxu0 0.0
        %1623 = vmatpush1.msra.mxu0 %v386
        %1624 = vmatprep.subr.mxu0 0.0
        %1625 = vmatpush1.msra.mxu0 %v389
        %1626 = vmatprep.subr.mxu0 0.0
        %1627 = vmatpush1.msra.mxu0 %v392
        %1628 = vmatprep.subr.mxu0 0.0
        %1629 = vmatpush1.msra.mxu0 %v395
        %1630 = vmatprep.subr.mxu0 0.0
        %1631 = vmatpush1.msra.mxu0 %v398
        %1632 = vmatprep.subr.mxu0 0.0
        %1633 = vmatpush1.msra.mxu0 %v401
        %1634 = vmatprep.subr.mxu0 0.0
        %1635 = vmatpush1.msra.mxu0 %v404
        %1636 = vmatprep.subr.mxu0 0.0
        %1637 = vmatpush1.msra.mxu0 %v407
        %1638 = vmatprep.subr.mxu0 0.0
        %1639 = vmatpush1.msra.mxu0 %v410
        %1640 = vmatprep.subr.mxu0 0.0
        %1641 = vmatpush1.msra.mxu0 %v413
        %1642 = vmatprep.subr.mxu0 0.0
        %1643 = vmatpush1.msra.mxu0 %v416
        %1644 = vmatprep.subr.mxu0 0.0
        %1645 = vmatpush1.msra.mxu0 %v419
        %1646 = vmatprep.subr.mxu0 0.0
        %1647 = vmatpush1.msra.mxu0 %v422
        %1648 = vmatprep.subr.mxu0 0.0
        %1649 = vmatpush1.msra.mxu0 %v425
        %1650 = vmatprep.subr.mxu0 0.0
        %1651 = vmatpush1.msra.mxu0 %v428
        %1652 = vmatprep.subr.mxu0 0.0
        %1653 = vmatpush1.msra.mxu0 %v431
        %1654 = vmatprep.subr.mxu0 0.0
        %1655 = vmatpush1.msra.mxu0 0.0
        %1656 = vmatprep.subr.mxu0 0.0
        %1657 = vmatpush1.msra.mxu0 0.0
        %1658 = vmatprep.subr.mxu0 0.0
        %1659 = vmatpush1.msra.mxu0 0.0
        %1660 = vmatprep.subr.mxu0 0.0
        %1661 = vmatpush1.msra.mxu0 0.0
        %1662 = vmatprep.subr.mxu0 0.0
        %1663 = vmatpush1.msra.mxu0 0.0
        %1664 = vmatprep.subr.mxu0 0.0
        %1665 = vmatpush1.msra.mxu0 0.0
        %1666 = vmatprep.subr.mxu0 0.0
        %1667 = vmatpush1.msra.mxu0 0.0
        %1668 = vmatprep.subr.mxu0 0.0
        %1669 = vmatpush1.msra.mxu0 0.0
        %1670 = vmatprep.subr.mxu0 0.0
        %1671 = vmatpush1.msra.mxu0 0.0
        %1672 = vmatprep.subr.mxu0 0.0
        %1673 = vmatpush1.msra.mxu0 0.0
        %1674 = vmatprep.subr.mxu0 0.0
        %1675 = vmatpush1.msra.mxu0 0.0
        %1676 = vmatprep.subr.mxu0 0.0
        %1677 = vmatpush1.msra.mxu0 0.0
        %1678 = vmatprep.subr.mxu0 0.0
        %1679 = vmatpush1.msra.mxu0 0.0
        %1680 = vmatprep.subr.mxu0 0.0
        %1681 = vmatpush1.msra.mxu0 0.0
        %1682 = vmatprep.subr.mxu0 0.0
        %1683 = vmatpush1.msra.mxu0 0.0
        %1684 = vmatprep.subr.mxu0 0.0
        %1685 = vmatpush1.msra.mxu0 0.0
        %1686 = vmatprep.mubr.f32.mxu0 0.0
        %1687 = vmatmul.mubr.f32.gmra.mrb[0].mxu0 %v1550
        %v1688 = vpop.f32.mrb[0].mxu0
        %v1689 = vadd.f32 %v445, %v1688
        %v1690 = vpop.f32.mrb[0].mxu0
        %1691 = vdwg.mxu0
        %s1692 = scalar_lea.vmem %s319, 72 [#allocation9]
        %1693 = vst [vmem:[%s1692] sm:$0xff] %v1618
        %1694 = vst [vmem:[%s1692 + $0x8] sm:$0xff] %v1620
        %1695 = vst [vmem:[%s1692 + $0x10] sm:$0xff] %v1689
        %1696 = vst [vmem:[#allocation2] sm:$0xff] %v1550
        %p1697 = scmp.eq.s32.totalorder %s31, 1
        // Predicated region
        $region57: #{tpu_custom_call.1} parent=39 // pred_check
          %p1698 = pneg %p1697
        $region58: #{tpu_custom_call.1} parent=39 // pred_check_branch
          %1700 = sbr.rel (%p1698) target = $region60
        $region59: #{tpu_custom_call.1} parent=39 // pred_region
          %1701 = vst [vmem:[#allocation10] sm:$0xff] %v1550
        $region60: #{tpu_custom_call.1} parent=39 // pred_fallthru
          _
        %s1702 = sand.u32 %s160, 1
        %s1703 = scalar_lea.sflag [#allocation5], %s1702
        %s1704 = sand.u32 %s160, 1
        %s1705 = smul.addr %s1704, 96
        %s1706 = scalar_lea.vmem [#allocation9], %s1705
        // Predicated region
        $region61: #{tpu_custom_call.1} parent=39 // pred_check
          %p1707 = pneg %p170
        $region62: #{tpu_custom_call.1} parent=39 // pred_check_branch
          %1709 = sbr.rel (%p1707) target = $region64
        $region63: #{tpu_custom_call.1} parent=39 // pred_region
          %s1710 = smul.u32 4, %s31
          %s1712 = ssub.s32 1536, 1536
          %1713 = vsyncadd %s1703, %s1712
          %s1714 = smul.addr %s30, 3
          %s1715 = smul.addr %s1710, 3
          %s1716 = sadd.s32 %s1714, %s1715
          %s1717 = smul.addr %s1716, 128
          %s1718 = scalar_lea.hbm %s5, %s1717
          %s1719 = sshll.u32 %s1706, 4
          %s1720 = int_to_ptr.vmem [resolvable:$true] %s1719
          %1725 = dma.vmem_to_hbm [thread:$0]  %s1720, 1536, %s1718, %s1703, 384, 384, 24
        $region64: #{tpu_custom_call.1} parent=39 // pred_fallthru
          _
        // Predicated region
        $region65: #{tpu_custom_call.1} parent=39 // pred_check
          %p1726 = pneg %p196
        $region66: #{tpu_custom_call.1} parent=39 // pred_check_branch
          %1728 = sbr.rel (%p1726) target = $region68
        $region67: #{tpu_custom_call.1} parent=39 // pred_region
          %s1730 = ssub.s32 128, 128
          %1731 = vsyncadd [#allocation11], %s1730
          %s1732 = smul.addr %s30, 128
          %s1733 = scalar_lea.hbm %s6, %s1732
          %s1735 = sshll.u32 [#allocation10], 4
          %s1736 = int_to_ptr.vmem [resolvable:$true] %s1735
          %1738 = dma.vmem_to_hbm [thread:$0]  %s1736, 128, %s1733, [#allocation11]
        $region68: #{tpu_custom_call.1} parent=39 // pred_fallthru
          _
        // Predicated region
        $region69: #{tpu_custom_call.1} parent=39 // pred_check
          %p1739 = pneg %p196
        $region70: #{tpu_custom_call.1} parent=39 // pred_check_branch
          %1741 = sbr.rel (%p1739) target = $region72
        $region71: #{tpu_custom_call.1} parent=39 // pred_region
          %1742 = dma.done [#allocation11], 128
        $region72: #{tpu_custom_call.1} parent=39 // pred_fallthru
          _
      $region40: #{tpu_custom_call.1} parent=5 // pred_fallthru
        _
      %p1743 = scmp.le.s32.totalorder 2, %s21
      // Predicated region
      $region73: #{tpu_custom_call.1} parent=5 // pred_check
        %p1744 = pneg %p1743
      $region74: #{tpu_custom_call.1} parent=5 // pred_check_branch
        %1746 = sbr.rel (%p1744) target = $region76
      $region75: #{tpu_custom_call.1} parent=5 // pred_region
        %s1747 = ssub.s32 %s21, 2
        // Predicated region
        $region77: #{tpu_custom_call.1} parent=75 // pred_check
          %p1748 = pneg %p176
        $region78: #{tpu_custom_call.1} parent=75 // pred_check_branch
          %1750 = sbr.rel (%p1748) target = $region80
        $region79: #{tpu_custom_call.1} parent=75 // pred_region
          %s1751 = sand.u32 %s161, 1
          %s1752 = scalar_lea.sflag [#allocation5], %s1751
          %s1753 = sand.u32 %s161, 1
          %s1754 = smul.addr %s1753, 96
          %s1755 = scalar_lea.vmem [#allocation9], %s1754
          %1756 = dma.done %s1752, 1536
        $region80: #{tpu_custom_call.1} parent=75 // pred_fallthru
          _
      $region76: #{tpu_custom_call.1} parent=5 // pred_fallthru
        _
    $region6: #{tpu_custom_call.1} parent=1 // loop_footer
      %s25 = sadd.s32 1, %s21
    $region7: #{tpu_custom_call.1} parent=1 // loop_footer_branch
      %20 = sbr.rel target = $region3
    $region8: #{tpu_custom_call.1} parent=1 // loop_exit
      _
    %1757 = vsyncpa [#allocation4], 1
    %s1758 = scalar_lea.sflag [#allocation4], 1
    %1759 = vsyncpa %s1758, 1
    %1760 = vsyncpa [#allocation7], 1
    %1761 = vsyncpa [#allocation5], 1
    %s1762 = scalar_lea.sflag [#allocation5], 1
    %1763 = vsyncpa %s1762, 1
    %1764 = vsyncpa [#allocation11], 1

</llo_original>
